<compile_context>
chip_gen: v7x
topology: tpu7x:2x2x1
jax: 0.10.0
libtpu: 0.0.40
codegen_flags: <defaults>
</compile_context>

<pallas_src>
import functools

import jax
import jax.numpy as jnp
from jax.experimental import pallas as pl
from jax.experimental.pallas import tpu as pltpu

SUPPORT_DICT_SIZE = 64          # synthetic charset size (blank + chars)
DEFAULT_INPUT_CHANNEL = 3
DEFAULT_INPUT_HEIGHT = 24


def _round_up(x, m):
    return ((x + m - 1) // m) * m


# ----------------------------------------------------------------------------
# Fused kernel: conv(3x3,pad=1)+ReLU  ->  permute/flatten  ->  Linear+tanh
#               ->  Linear(prediction), one (batch, W-tile) per grid step.
# ----------------------------------------------------------------------------
def _fused_kernel(x_ref, g_ref, bf_ref, w1_ref, b1_ref, w2_ref, b2_ref, o_ref):
    """
    x_ref  : [W_pad+2, C*H]  padded column slab for this batch (resident over W tiles)
    g_ref  : [3, C*H, Cf*H]  conv weight folded into 3 shift matrices (kw = 0,1,2)
    bf_ref : [1, Cf*H]       conv bias broadcast over H
    w1_ref : [Cf*H, hidden]  sequential_model Linear weight
    b1_ref : [1, hidden]
    w2_ref : [hidden, Vp]    prediction Linear weight, lane-padded to 128
    b2_ref : [1, Vp]
    o_ref  : [tile_w, Vp]    lane-dense output tile
    """
    j = pl.program_id(1)
    tile_w = o_ref.shape[0]
    cfh = g_ref.shape[2]
    base = j * tile_w

    # Conv2d + permute(0,3,1,2) + flatten(2) fused as 3 W-shifted matmuls.
    acc = jnp.zeros((tile_w, cfh), jnp.float32)
    for kw in range(3):  # static unroll
        xw = x_ref[pl.ds(base + kw, tile_w), :]
        acc = acc + jnp.dot(xw, g_ref[kw], preferred_element_type=jnp.float32)

    feat = jnp.maximum(acc + bf_ref[...], 0.0)                      # ReLU (f32)

    cdt = w1_ref.dtype
    ctx = jnp.tanh(
        jnp.dot(feat.astype(cdt), w1_ref[...], preferred_element_type=jnp.float32)
        + b1_ref[...])
    out = (jnp.dot(ctx.astype(cdt), w2_ref[...], preferred_element_type=jnp.float32)
           + b2_ref[...])
    o_ref[...] = out.astype(o_ref.dtype)


def recognition_forward(params, x, *, compute_dtype=jnp.float32, tile_w=512):
    """x: [B, C, H, W] float32 (NCHW, as PyTorch). Returns [B, W, SUPPORT_DICT_SIZE]."""
    b, c, h, w = x.shape
    conv_w = params["conv_w"]                     # [Cf, C, 3, 3] (torch OIHW)
    cf = conv_w.shape[0]
    hidden = params["seq_w"].shape[1]
    v = params["pred_w"].shape[1]
    ch = c * h
    cfh = cf * h

    tile_w = min(tile_w, _round_up(w, 8))
    w_pad = _round_up(w, tile_w)
    vp = _round_up(v, 128)                        # lane-pad prediction output

    # ---- fold conv weight into 3 shift matrices G[kw]: [C*H, Cf*H] ----------
    # S[kh][h_in, h_out] = 1 iff h_in == h_out + kh - 1  (zero-pad in H is implicit)
    s_mats = jnp.stack([jnp.eye(h, h, k=1 - kh, dtype=jnp.float32) for kh in range(3)])
    g = jnp.einsum("ocuv,uij->vcioj", conv_w, s_mats).reshape(3, ch, cfh)
    bias_feat = jnp.repeat(params["conv_b"], h).reshape(1, cfh)

    w1 = params["seq_w"]
    b1 = params["seq_b"].reshape(1, hidden)
    w2 = jnp.pad(params["pred_w"], ((0, 0), (0, vp - v)))
    b2 = jnp.pad(params["pred_b"], (0, vp - v)).reshape(1, vp)

    # ---- input layout: [B, W_pad+2, C*H]; one zero halo column each side ----
    xs = x.transpose(0, 3, 1, 2).reshape(b, w, ch)           # Xs[b, w, c*H+h] = x[b,c,h,w]
    xs = jnp.pad(xs, ((0, 0), (1, 1 + w_pad - w), (0, 0)))

    if compute_dtype != jnp.float32:
        xs = xs.astype(compute_dtype)
        g = g.astype(compute_dtype)
        w1 = w1.astype(compute_dtype)
        w2 = w2.astype(compute_dtype)

    out = pl.pallas_call(
        _fused_kernel,
        out_shape=jax.ShapeDtypeStruct((b, w_pad, vp), jnp.float32),
        grid_spec=pltpu.PrefetchScalarGridSpec(
            num_scalar_prefetch=0,
            grid=(b, w_pad // tile_w),
            in_specs=[
                pl.BlockSpec((None, w_pad + 2, ch), lambda bi, wi: (bi, 0, 0)),
                pl.BlockSpec((3, ch, cfh), lambda bi, wi: (0, 0, 0)),
                pl.BlockSpec((1, cfh), lambda bi, wi: (0, 0)),
                pl.BlockSpec((cfh, hidden), lambda bi, wi: (0, 0)),
                pl.BlockSpec((1, hidden), lambda bi, wi: (0, 0)),
                pl.BlockSpec((hidden, vp), lambda bi, wi: (0, 0)),
                pl.BlockSpec((1, vp), lambda bi, wi: (0, 0)),
            ],
            out_specs=pl.BlockSpec((None, tile_w, vp), lambda bi, wi: (bi, wi, 0)),
        ),
        compiler_params=pltpu.CompilerParams(
            dimension_semantics=("parallel", "parallel"),
            vmem_limit_bytes=32 * 1024 * 1024),
    )(xs, g, bias_feat, w1, b1, w2, b2)

    return out[:, :w, :v]


# ----------------------------------------------------------------------------
# Parameter construction + pure-jnp reference (mirrors the PyTorch semantics)
# ----------------------------------------------------------------------------
def make_params(key, input_channel, input_height, cf, hidden):
    ks = jax.random.split(key, 6)
    din = cf * input_height

    def init(k, shape, fan_in):
        return (jax.random.normal(k, shape, jnp.float32) / jnp.sqrt(fan_in)).astype(jnp.float32)

    return {
        "conv_w": init(ks[0], (cf, input_channel, 3, 3), input_channel * 9),
        "conv_b": init(ks[1], (cf,), 1.0) * 0.1,
        "seq_w":  init(ks[2], (din, hidden), din),
        "seq_b":  init(ks[3], (hidden,), 1.0) * 0.1,
        "pred_w": init(ks[4], (hidden, SUPPORT_DICT_SIZE), hidden),
        "pred_b": init(ks[5], (SUPPORT_DICT_SIZE,), 1.0) * 0.1,
    }


def _reference_forward(params, x):
    b, c, h, w = x.shape
    cf = params["conv_w"].shape[0]
    conv = jax.lax.conv_general_dilated(
        x, params["conv_w"], window_strides=(1, 1), padding="SAME",
        dimension_numbers=("NCHW", "OIHW", "NCHW"))
    conv = jnp.maximum(conv + params["conv_b"][None, :, None, None], 0.0)   # (B,Cf,H,W)
    vf = jnp.transpose(conv, (0, 3, 1, 2)).reshape(b, w, cf * h)            # permute+flatten
    ctx = jnp.tanh(vf @ params["seq_w"] + params["seq_b"])
    return ctx @ params["pred_w"] + params["pred_b"]


if __name__ == "__main__":
    key = jax.random.PRNGKey(0)
    kx, kp = jax.random.split(key)

    B, C, H, W = 2, DEFAULT_INPUT_CHANNEL, DEFAULT_INPUT_HEIGHT, 16
    CF, HIDDEN = 16, 256   # Cf*H = 384 (lane-aligned), module-default hidden size

    x = jax.random.uniform(kx, (B, C, H, W), jnp.float32)
    params = make_params(kp, C, H, CF, HIDDEN)
    ref = _reference_forward(params, x)

    # f32 HBM operands (tight check against the reference).
    fwd = jax.jit(functools.partial(recognition_forward, params))
    out = jax.block_until_ready(fwd(x))
    assert out.shape == (B, W, SUPPORT_DICT_SIZE), out.shape
    assert jnp.allclose(out, ref, atol=1e-3, rtol=1e-3), float(jnp.max(jnp.abs(out - ref)))

    # bf16 HBM operands, f32 MXU accumulation (halves HBM traffic on the slabs).
    fwd_bf16 = jax.jit(functools.partial(recognition_forward, params,
                                         compute_dtype=jnp.bfloat16))
    out_bf = jax.block_until_ready(fwd_bf16(x))
    assert out_bf.shape == (B, W, SUPPORT_DICT_SIZE), out_bf.shape
    assert float(jnp.max(jnp.abs(out_bf - ref))) < 0.1, float(jnp.max(jnp.abs(out_bf - ref)))

    print("KERNEL_OK")
</pallas_src>

<mosaic_0001>
module attributes {stable_mosaic.version = 11 : i64} {
  func.func @_fused_kernel(%arg0: i32, %arg1: i32, %arg2: memref<1x18x72xf32, #tpu.memory_space<vmem>>, %arg3: memref<3x72x384xf32, #tpu.memory_space<vmem>>, %arg4: memref<1x384xf32, #tpu.memory_space<vmem>>, %arg5: memref<384x256xf32, #tpu.memory_space<vmem>>, %arg6: memref<1x256xf32, #tpu.memory_space<vmem>>, %arg7: memref<256x128xf32, #tpu.memory_space<vmem>>, %arg8: memref<1x128xf32, #tpu.memory_space<vmem>>, %arg9: memref<1x16x128xf32, #tpu.memory_space<vmem>>) attributes {dimension_semantics = [#tpu.dimension_semantics<parallel>, #tpu.dimension_semantics<parallel>], iteration_bounds = array<i64: 2, 1>, scalar_prefetch = 0 : i64, scratch_operands = 0 : i64, tpu.core_type = #tpu.core_type<tc>, window_params = [{transform_indices = @transform_0, window_bounds = array<i64: 1, 18, 72>}, {pipeline_mode = #tpu.pipeline_mode<synchronous>, transform_indices = @transform_1, window_bounds = array<i64: 3, 72, 384>}, {pipeline_mode = #tpu.pipeline_mode<synchronous>, transform_indices = @transform_2, window_bounds = array<i64: 1, 384>}, {pipeline_mode = #tpu.pipeline_mode<synchronous>, transform_indices = @transform_3, window_bounds = array<i64: 384, 256>}, {pipeline_mode = #tpu.pipeline_mode<synchronous>, transform_indices = @transform_4, window_bounds = array<i64: 1, 256>}, {pipeline_mode = #tpu.pipeline_mode<synchronous>, transform_indices = @transform_5, window_bounds = array<i64: 256, 128>}, {pipeline_mode = #tpu.pipeline_mode<synchronous>, transform_indices = @transform_6, window_bounds = array<i64: 1, 128>}, {transform_indices = @transform_7, window_bounds = array<i64: 1, 16, 128>}]} {
    %c16_i32 = arith.constant 16 : i32
    %0 = arith.muli %arg1, %c16_i32 : i32
    %cst = arith.constant 0.000000e+00 : f32
    %1 = vector.broadcast %cst : f32 to vector<16x384xf32>
    %c0_i32 = arith.constant 0 : i32
    %2 = arith.addi %0, %c0_i32 : i32
    %c0 = arith.constant 0 : index
    %3 = arith.index_cast %2 : i32 to index
    %c0_0 = arith.constant 0 : index
    %4 = vector.load %arg2[%c0, %3, %c0_0] : memref<1x18x72xf32, #tpu.memory_space<vmem>>, vector<1x16x72xf32>
    %5 = vector.shape_cast %4 : vector<1x16x72xf32> to vector<16x72xf32>
    %c0_1 = arith.constant 0 : index
    %c0_2 = arith.constant 0 : index
    %c0_3 = arith.constant 0 : index
    %6 = vector.load %arg3[%c0_1, %c0_2, %c0_3] : memref<3x72x384xf32, #tpu.memory_space<vmem>>, vector<1x72x384xf32>
    %7 = vector.shape_cast %6 : vector<1x72x384xf32> to vector<72x384xf32>
    %cst_4 = arith.constant dense<0.000000e+00> : vector<16x384xf32>
    %8 = tpu.matmul %5, %7, %cst_4 {dimension_numbers = #tpu.dot_dimension_numbers<[1], [0], [0], [1], [0, 0, 1, 1], [], []>} : vector<16x72xf32>, vector<72x384xf32>, vector<16x384xf32> -> vector<16x384xf32>
    %9 = arith.addf %1, %8 : vector<16x384xf32>
    %c1_i32 = arith.constant 1 : i32
    %10 = arith.addi %0, %c1_i32 : i32
    %c0_5 = arith.constant 0 : index
    %11 = arith.index_cast %10 : i32 to index
    %c0_6 = arith.constant 0 : index
    %12 = vector.load %arg2[%c0_5, %11, %c0_6] : memref<1x18x72xf32, #tpu.memory_space<vmem>>, vector<1x16x72xf32>
    %13 = vector.shape_cast %12 : vector<1x16x72xf32> to vector<16x72xf32>
    %c1 = arith.constant 1 : index
    %c0_7 = arith.constant 0 : index
    %c0_8 = arith.constant 0 : index
    %14 = vector.load %arg3[%c1, %c0_7, %c0_8] : memref<3x72x384xf32, #tpu.memory_space<vmem>>, vector<1x72x384xf32>
    %15 = vector.shape_cast %14 : vector<1x72x384xf32> to vector<72x384xf32>
    %cst_9 = arith.constant dense<0.000000e+00> : vector<16x384xf32>
    %16 = tpu.matmul %13, %15, %cst_9 {dimension_numbers = #tpu.dot_dimension_numbers<[1], [0], [0], [1], [0, 0, 1, 1], [], []>} : vector<16x72xf32>, vector<72x384xf32>, vector<16x384xf32> -> vector<16x384xf32>
    %17 = arith.addf %9, %16 : vector<16x384xf32>
    %c2_i32 = arith.constant 2 : i32
    %18 = arith.addi %0, %c2_i32 : i32
    %c0_10 = arith.constant 0 : index
    %19 = arith.index_cast %18 : i32 to index
    %c0_11 = arith.constant 0 : index
    %20 = vector.load %arg2[%c0_10, %19, %c0_11] : memref<1x18x72xf32, #tpu.memory_space<vmem>>, vector<1x16x72xf32>
    %21 = vector.shape_cast %20 : vector<1x16x72xf32> to vector<16x72xf32>
    %c2 = arith.constant 2 : index
    %c0_12 = arith.constant 0 : index
    %c0_13 = arith.constant 0 : index
    %22 = vector.load %arg3[%c2, %c0_12, %c0_13] : memref<3x72x384xf32, #tpu.memory_space<vmem>>, vector<1x72x384xf32>
    %23 = vector.shape_cast %22 : vector<1x72x384xf32> to vector<72x384xf32>
    %cst_14 = arith.constant dense<0.000000e+00> : vector<16x384xf32>
    %24 = tpu.matmul %21, %23, %cst_14 {dimension_numbers = #tpu.dot_dimension_numbers<[1], [0], [0], [1], [0, 0, 1, 1], [], []>} : vector<16x72xf32>, vector<72x384xf32>, vector<16x384xf32> -> vector<16x384xf32>
    %25 = arith.addf %17, %24 : vector<16x384xf32>
    %c0_15 = arith.constant 0 : index
    %c0_16 = arith.constant 0 : index
    %26 = vector.load %arg4[%c0_15, %c0_16] : memref<1x384xf32, #tpu.memory_space<vmem>>, vector<1x384xf32>
    %27 = vector.broadcast %26 : vector<1x384xf32> to vector<16x384xf32>
    %28 = arith.addf %25, %27 : vector<16x384xf32>
    %cst_17 = arith.constant 0.000000e+00 : f32
    %29 = vector.broadcast %cst_17 : f32 to vector<16x384xf32>
    %30 = arith.maximumf %28, %29 : vector<16x384xf32>
    %c0_18 = arith.constant 0 : index
    %c0_19 = arith.constant 0 : index
    %31 = vector.load %arg5[%c0_18, %c0_19] : memref<384x256xf32, #tpu.memory_space<vmem>>, vector<384x256xf32>
    %cst_20 = arith.constant dense<0.000000e+00> : vector<16x256xf32>
    %32 = tpu.matmul %30, %31, %cst_20 {dimension_numbers = #tpu.dot_dimension_numbers<[1], [0], [0], [1], [0, 0, 1, 1], [], []>} : vector<16x384xf32>, vector<384x256xf32>, vector<16x256xf32> -> vector<16x256xf32>
    %c0_21 = arith.constant 0 : index
    %c0_22 = arith.constant 0 : index
    %33 = vector.load %arg6[%c0_21, %c0_22] : memref<1x256xf32, #tpu.memory_space<vmem>>, vector<1x256xf32>
    %34 = vector.broadcast %33 : vector<1x256xf32> to vector<16x256xf32>
    %35 = arith.addf %32, %34 : vector<16x256xf32>
    %36 = math.tanh %35 : vector<16x256xf32>
    %c0_23 = arith.constant 0 : index
    %c0_24 = arith.constant 0 : index
    %37 = vector.load %arg7[%c0_23, %c0_24] : memref<256x128xf32, #tpu.memory_space<vmem>>, vector<256x128xf32>
    %cst_25 = arith.constant dense<0.000000e+00> : vector<16x128xf32>
    %38 = tpu.matmul %36, %37, %cst_25 {dimension_numbers = #tpu.dot_dimension_numbers<[1], [0], [0], [1], [0, 0, 1, 1], [], []>} : vector<16x256xf32>, vector<256x128xf32>, vector<16x128xf32> -> vector<16x128xf32>
    %c0_26 = arith.constant 0 : index
    %c0_27 = arith.constant 0 : index
    %39 = vector.load %arg8[%c0_26, %c0_27] : memref<1x128xf32, #tpu.memory_space<vmem>>, vector<1x128xf32>
    %40 = vector.broadcast %39 : vector<1x128xf32> to vector<16x128xf32>
    %41 = arith.addf %38, %40 : vector<16x128xf32>
    %c0_28 = arith.constant 0 : index
    %c0_29 = arith.constant 0 : index
    %c0_30 = arith.constant 0 : index
    %42 = vector.load %arg9[%c0_28, %c0_29, %c0_30] : memref<1x16x128xf32, #tpu.memory_space<vmem>>, vector<1x16x128xf32>
    %43 = vector.shape_cast %42 : vector<1x16x128xf32> to vector<16x128xf32>
    %44 = vector.shape_cast %41 : vector<16x128xf32> to vector<1x16x128xf32>
    tpu.vector_store %arg9[%c0_28, %c0_29, %c0_30], %44 {strides = array<i32>} : memref<1x16x128xf32, #tpu.memory_space<vmem>>, vector<1x16x128xf32>,
    return
  }
  func.func @transform_0(%arg0: i32, %arg1: i32) -> (i32, i32, i32) {
    %c0_i32 = arith.constant 0 : i32
    %c0_i32_0 = arith.constant 0 : i32
    %c0_i32_1 = arith.constant 0 : i32
    return %arg0, %c0_i32, %c0_i32_0 : i32, i32, i32
  }
  func.func @transform_1(%arg0: i32, %arg1: i32) -> (i32, i32, i32) {
    %c0_i32 = arith.constant 0 : i32
    %c0_i32_0 = arith.constant 0 : i32
    %c0_i32_1 = arith.constant 0 : i32
    %c0_i32_2 = arith.constant 0 : i32
    return %c0_i32, %c0_i32_0, %c0_i32_1 : i32, i32, i32
  }
  func.func @transform_2(%arg0: i32, %arg1: i32) -> (i32, i32) {
    %c0_i32 = arith.constant 0 : i32
    %c0_i32_0 = arith.constant 0 : i32
    %c0_i32_1 = arith.constant 0 : i32
    return %c0_i32, %c0_i32_0 : i32, i32
  }
  func.func @transform_3(%arg0: i32, %arg1: i32) -> (i32, i32) {
    %c0_i32 = arith.constant 0 : i32
    %c0_i32_0 = arith.constant 0 : i32
    %c0_i32_1 = arith.constant 0 : i32
    return %c0_i32, %c0_i32_0 : i32, i32
  }
  func.func @transform_4(%arg0: i32, %arg1: i32) -> (i32, i32) {
    %c0_i32 = arith.constant 0 : i32
    %c0_i32_0 = arith.constant 0 : i32
    %c0_i32_1 = arith.constant 0 : i32
    return %c0_i32, %c0_i32_0 : i32, i32
  }
  func.func @transform_5(%arg0: i32, %arg1: i32) -> (i32, i32) {
    %c0_i32 = arith.constant 0 : i32
    %c0_i32_0 = arith.constant 0 : i32
    %c0_i32_1 = arith.constant 0 : i32
    return %c0_i32, %c0_i32_0 : i32, i32
  }
  func.func @transform_6(%arg0: i32, %arg1: i32) -> (i32, i32) {
    %c0_i32 = arith.constant 0 : i32
    %c0_i32_0 = arith.constant 0 : i32
    %c0_i32_1 = arith.constant 0 : i32
    return %c0_i32, %c0_i32_0 : i32, i32
  }
  func.func @transform_7(%arg0: i32, %arg1: i32) -> (i32, i32, i32) {
    %c0_i32 = arith.constant 0 : i32
    %c0_i32_0 = arith.constant 0 : i32
    return %arg0, %arg1, %c0_i32 : i32, i32, i32
  }
}

</mosaic_0001>

<llo_original>
// kernel: recognition_forward.1
$region0: #{recognition_forward.1}
  #allocation0 [shape = 'u32[]', space=smem, size = 0x4, offset = 0x4, fixed_abs, tag = 'smem constant byte address 0x4 - core index']
  #allocation1 [shape = 'u32[144,128]{1,0:T(1,128)}', space=vmem, size = 0x12000, scoped, tag = 'internal scratch']
  %s0 = inlined_call_operand.vmem [shape: f32[2,18,72], index: 0, kind: input, shape index: {}]
  %s1 = inlined_call_operand.vmem [shape: f32[3,72,384], index: 1, kind: input, shape index: {}]
  %s2 = inlined_call_operand.vmem [shape: f32[1,384], index: 2, kind: input, shape index: {}]
  %s3 = inlined_call_operand.vmem [shape: f32[384,256], index: 3, kind: input, shape index: {}]
  %s4 = inlined_call_operand.vmem [shape: f32[1,256], index: 4, kind: input, shape index: {}]
  %s5 = inlined_call_operand.vmem [shape: f32[256,128], index: 5, kind: input, shape index: {}]
  %s6 = inlined_call_operand.vmem [shape: f32[1,128], index: 6, kind: input, shape index: {}]
  %s7 = inlined_call_operand.hbm [shape: f32[2,16,128], index: 7, kind: output, shape index: {}]
  %s8 = sld [smem:[#allocation0]]
  $region61: #{recognition_forward.1} parent=0
    _
  %s10 = ssub.s32 1, %s8
  %s11 = scalar_select 0, %s10, %s8
  $region1: #{recognition_forward.1} parent=0
    #allocation2 [shape = 'u8[16384]{0}', space=vmem, size = 0x4000, scoped, tag = 'output window, operand 0']
    #allocation3 [shape = 's32[2]{0}', space=sflag, size = 0x8, scoped, tag = 'scoped memory for recognition_forward.1']
    %12 = vsyncpa [#allocation3], 0
    %s13 = scalar_lea.sflag [#allocation3], 1
    %14 = vsyncpa %s13, 0
    loop: start=0, step=1, limit=4
    $region2: #{recognition_forward.1} parent=1 // loop_pre_header
      _
    $region3: #{recognition_forward.1} parent=1 // loop_header
      %s16 = sphi 0, %s20
      %p17 = scmp.ge.s32.totalorder %s16, 4
      %s23 = sphi 0, %s35
      %s24 = sphi 0, %s31
      %s25 = sphi 0, %s23
      %s26 = sphi 0, %s24
      %s27 = sphi 0, %s25
      %s28 = sphi 0, %s26
      %s38 = sphi 0, %s40
      %s41 = sphi 0, %s38
      %s42 = sphi 0, %s41
      %s58 = sphi 0, %s42
      %s62 = sphi 0, %s62
      %s64 = sphi 0, %s62
      %s65 = sphi 0, %s64
      %s79 = sphi 0, %s65
      %s83 = sphi 0, %s83
      %s85 = sphi 0, %s83
      %s86 = sphi 0, %s85
      %s100 = sphi 0, %s86
      %s104 = sphi 0, %s104
      %s106 = sphi 0, %s104
      %s107 = sphi 0, %s106
      %s121 = sphi 0, %s107
      %s125 = sphi 0, %s125
      %s127 = sphi 0, %s125
      %s128 = sphi 0, %s127
      %s142 = sphi 0, %s128
      %s146 = sphi 0, %s146
      %s148 = sphi 0, %s146
      %s149 = sphi 0, %s148
      %s163 = sphi 0, %s149
      %s167 = sphi 0, %s167
      %s169 = sphi 0, %s167
      %s170 = sphi 0, %s169
      %s184 = sphi 0, %s170
      %s192 = sphi 0, %s194
      %s195 = sphi 0, %s192
      %s196 = sphi 0, %s195
      %s212 = sphi 0, %s196
    $region4: #{recognition_forward.1} parent=1 // loop_header_branch
      %19 = sbr.rel (%p17) target = $region8
    $region5: #{recognition_forward.1} parent=1 // loop_body
      %s21 = ssub.s32 %s16, 1
      %s22 = ssub.s32 %s16, 2
      %s29 = sadd.s32 1, %s24
      %p30 = scmp.ge.s32.totalorder %s29, 1
      %s31 = scalar_select %p30, 0, %s29
      %s32 = sadd.s32 1, %s23
      %s33 = scalar_select %p30, %s32, %s23
      %p34 = scmp.ge.s32.totalorder %s33, 2
      %s35 = scalar_select %p34, 0, %s33
      %s36 = ssub.s32 %s23, %s35
      %p37 = scmp.eq.s32.totalorder %s36, 0
      %s39 = sadd.s32 %s38, 1
      %s40 = scalar_select %p37, %s38, %s39
      %p43 = pneg %p37
      %p44 = scmp.eq.s32.totalorder %s16, 1
      %p45 = por %p43, %p44
      %p46 = scmp.ne.s32.totalorder %s38, %s41
      %p47 = scmp.eq.s32.totalorder %s16, 0
      %p48 = por %p46, %p47
      %p49 = scmp.ne.s32.totalorder %s38, %s41
      %p50 = scmp.eq.s32.totalorder %s21, 1
      %p51 = por %p49, %p50
      %p52 = scmp.ne.s32.totalorder %s41, %s42
      %p53 = scmp.eq.s32.totalorder %s21, 0
      %p54 = por %p52, %p53
      %p55 = scmp.ne.s32.totalorder %s41, %s42
      %p56 = scmp.eq.s32.totalorder %s22, 1
      %p57 = por %p55, %p56
      %p59 = scmp.ne.s32.totalorder %s42, %s58
      %p60 = scmp.eq.s32.totalorder %s22, 0
      %p61 = por %p59, %p60
      %s63 = sadd.s32 %s62, 1
      %p66 = scmp.eq.s32.totalorder %s16, 1
      %p67 = scmp.ne.s32.totalorder %s62, %s64
      %p68 = scmp.eq.s32.totalorder %s16, 0
      %p69 = por %p67, %p68
      %p70 = scmp.ne.s32.totalorder %s62, %s64
      %p71 = scmp.eq.s32.totalorder %s21, 1
      %p72 = por %p70, %p71
      %p73 = scmp.ne.s32.totalorder %s64, %s65
      %p74 = scmp.eq.s32.totalorder %s21, 0
      %p75 = por %p73, %p74
      %p76 = scmp.ne.s32.totalorder %s64, %s65
      %p77 = scmp.eq.s32.totalorder %s22, 1
      %p78 = por %p76, %p77
      %p80 = scmp.ne.s32.totalorder %s65, %s79
      %p81 = scmp.eq.s32.totalorder %s22, 0
      %p82 = por %p80, %p81
      %s84 = sadd.s32 %s83, 1
      %p87 = scmp.eq.s32.totalorder %s16, 1
      %p88 = scmp.ne.s32.totalorder %s83, %s85
      %p89 = scmp.eq.s32.totalorder %s16, 0
      %p90 = por %p88, %p89
      %p91 = scmp.ne.s32.totalorder %s83, %s85
      %p92 = scmp.eq.s32.totalorder %s21, 1
      %p93 = por %p91, %p92
      %p94 = scmp.ne.s32.totalorder %s85, %s86
      %p95 = scmp.eq.s32.totalorder %s21, 0
      %p96 = por %p94, %p95
      %p97 = scmp.ne.s32.totalorder %s85, %s86
      %p98 = scmp.eq.s32.totalorder %s22, 1
      %p99 = por %p97, %p98
      %p101 = scmp.ne.s32.totalorder %s86, %s100
      %p102 = scmp.eq.s32.totalorder %s22, 0
      %p103 = por %p101, %p102
      %s105 = sadd.s32 %s104, 1
      %p108 = scmp.eq.s32.totalorder %s16, 1
      %p109 = scmp.ne.s32.totalorder %s104, %s106
      %p110 = scmp.eq.s32.totalorder %s16, 0
      %p111 = por %p109, %p110
      %p112 = scmp.ne.s32.totalorder %s104, %s106
      %p113 = scmp.eq.s32.totalorder %s21, 1
      %p114 = por %p112, %p113
      %p115 = scmp.ne.s32.totalorder %s106, %s107
      %p116 = scmp.eq.s32.totalorder %s21, 0
      %p117 = por %p115, %p116
      %p118 = scmp.ne.s32.totalorder %s106, %s107
      %p119 = scmp.eq.s32.totalorder %s22, 1
      %p120 = por %p118, %p119
      %p122 = scmp.ne.s32.totalorder %s107, %s121
      %p123 = scmp.eq.s32.totalorder %s22, 0
      %p124 = por %p122, %p123
      %s126 = sadd.s32 %s125, 1
      %p129 = scmp.eq.s32.totalorder %s16, 1
      %p130 = scmp.ne.s32.totalorder %s125, %s127
      %p131 = scmp.eq.s32.totalorder %s16, 0
      %p132 = por %p130, %p131
      %p133 = scmp.ne.s32.totalorder %s125, %s127
      %p134 = scmp.eq.s32.totalorder %s21, 1
      %p135 = por %p133, %p134
      %p136 = scmp.ne.s32.totalorder %s127, %s128
      %p137 = scmp.eq.s32.totalorder %s21, 0
      %p138 = por %p136, %p137
      %p139 = scmp.ne.s32.totalorder %s127, %s128
      %p140 = scmp.eq.s32.totalorder %s22, 1
      %p141 = por %p139, %p140
      %p143 = scmp.ne.s32.totalorder %s128, %s142
      %p144 = scmp.eq.s32.totalorder %s22, 0
      %p145 = por %p143, %p144
      %s147 = sadd.s32 %s146, 1
      %p150 = scmp.eq.s32.totalorder %s16, 1
      %p151 = scmp.ne.s32.totalorder %s146, %s148
      %p152 = scmp.eq.s32.totalorder %s16, 0
      %p153 = por %p151, %p152
      %p154 = scmp.ne.s32.totalorder %s146, %s148
      %p155 = scmp.eq.s32.totalorder %s21, 1
      %p156 = por %p154, %p155
      %p157 = scmp.ne.s32.totalorder %s148, %s149
      %p158 = scmp.eq.s32.totalorder %s21, 0
      %p159 = por %p157, %p158
      %p160 = scmp.ne.s32.totalorder %s148, %s149
      %p161 = scmp.eq.s32.totalorder %s22, 1
      %p162 = por %p160, %p161
      %p164 = scmp.ne.s32.totalorder %s149, %s163
      %p165 = scmp.eq.s32.totalorder %s22, 0
      %p166 = por %p164, %p165
      %s168 = sadd.s32 %s167, 1
      %p171 = scmp.eq.s32.totalorder %s16, 1
      %p172 = scmp.ne.s32.totalorder %s167, %s169
      %p173 = scmp.eq.s32.totalorder %s16, 0
      %p174 = por %p172, %p173
      %p175 = scmp.ne.s32.totalorder %s167, %s169
      %p176 = scmp.eq.s32.totalorder %s21, 1
      %p177 = por %p175, %p176
      %p178 = scmp.ne.s32.totalorder %s169, %s170
      %p179 = scmp.eq.s32.totalorder %s21, 0
      %p180 = por %p178, %p179
      %p181 = scmp.ne.s32.totalorder %s169, %s170
      %p182 = scmp.eq.s32.totalorder %s22, 1
      %p183 = por %p181, %p182
      %p185 = scmp.ne.s32.totalorder %s170, %s184
      %p186 = scmp.eq.s32.totalorder %s22, 0
      %p187 = por %p185, %p186
      %s188 = ssub.s32 %s23, %s35
      %s189 = ssub.s32 %s24, %s31
      %s190 = sor.u32 %s188, %s189
      %p191 = scmp.eq.s32.totalorder %s190, 0
      %s193 = sadd.s32 %s192, 1
      %s194 = scalar_select %p191, %s192, %s193
      %p197 = pneg %p191
      %p198 = scmp.eq.s32.totalorder %s16, 1
      %p199 = por %p197, %p198
      %p200 = scmp.ne.s32.totalorder %s192, %s195
      %p201 = scmp.eq.s32.totalorder %s16, 0
      %p202 = por %p200, %p201
      %p203 = scmp.ne.s32.totalorder %s192, %s195
      %p204 = scmp.eq.s32.totalorder %s21, 1
      %p205 = por %p203, %p204
      %p206 = scmp.ne.s32.totalorder %s195, %s196
      %p207 = scmp.eq.s32.totalorder %s21, 0
      %p208 = por %p206, %p207
      %p209 = scmp.ne.s32.totalorder %s195, %s196
      %p210 = scmp.eq.s32.totalorder %s22, 1
      %p211 = por %p209, %p210
      %p213 = scmp.ne.s32.totalorder %s196, %s212
      %p214 = scmp.eq.s32.totalorder %s22, 0
      %p215 = por %p213, %p214
      %p216 = scmp.le.s32.totalorder 1, %s16
      %p217 = scmp.lt.s32.totalorder %s16, 3
      %p218 = pnand %p216, %p217
      %p219 = pneg %p218
      // Predicated region
      $region9: #{recognition_forward.1} parent=5 // pred_check
        _
      $region10: #{recognition_forward.1} parent=5 // pred_check_branch
        %221 = sbr.rel (%p218) target = $region12
      $region11: #{recognition_forward.1} parent=5 // pred_region
        %s222 = ssub.s32 %s16, 1
        // Predicated region
        $region13: #{recognition_forward.1} parent=11 // pred_check
          %p223 = pneg %p75
        $region14: #{recognition_forward.1} parent=11 // pred_check_branch
          %225 = sbr.rel (%p223) target = $region16
        $region15: #{recognition_forward.1} parent=11 // pred_region
          _
        $region16: #{recognition_forward.1} parent=11 // pred_fallthru
          _
        // Predicated region
        $region17: #{recognition_forward.1} parent=11 // pred_check
          %p226 = pneg %p96
        $region18: #{recognition_forward.1} parent=11 // pred_check_branch
          %228 = sbr.rel (%p226) target = $region20
        $region19: #{recognition_forward.1} parent=11 // pred_region
          _
        $region20: #{recognition_forward.1} parent=11 // pred_fallthru
          _
        // Predicated region
        $region21: #{recognition_forward.1} parent=11 // pred_check
          %p229 = pneg %p117
        $region22: #{recognition_forward.1} parent=11 // pred_check_branch
          %231 = sbr.rel (%p229) target = $region24
        $region23: #{recognition_forward.1} parent=11 // pred_region
          _
        $region24: #{recognition_forward.1} parent=11 // pred_fallthru
          _
        // Predicated region
        $region25: #{recognition_forward.1} parent=11 // pred_check
          %p232 = pneg %p138
        $region26: #{recognition_forward.1} parent=11 // pred_check_branch
          %234 = sbr.rel (%p232) target = $region28
        $region27: #{recognition_forward.1} parent=11 // pred_region
          _
        $region28: #{recognition_forward.1} parent=11 // pred_fallthru
          _
        // Predicated region
        $region29: #{recognition_forward.1} parent=11 // pred_check
          %p235 = pneg %p159
        $region30: #{recognition_forward.1} parent=11 // pred_check_branch
          %237 = sbr.rel (%p235) target = $region32
        $region31: #{recognition_forward.1} parent=11 // pred_region
          _
        $region32: #{recognition_forward.1} parent=11 // pred_fallthru
          _
        // Predicated region
        $region33: #{recognition_forward.1} parent=11 // pred_check
          %p238 = pneg %p180
        $region34: #{recognition_forward.1} parent=11 // pred_check_branch
          %240 = sbr.rel (%p238) target = $region36
        $region35: #{recognition_forward.1} parent=11 // pred_region
          _
        $region36: #{recognition_forward.1} parent=11 // pred_fallthru
          _
      $region12: #{recognition_forward.1} parent=5 // pred_fallthru
        _
      %p241 = scmp.lt.s32.totalorder %s16, 2
      // Predicated region
      $region37: #{recognition_forward.1} parent=5 // pred_check
        %p242 = pneg %p241
      $region38: #{recognition_forward.1} parent=5 // pred_check_branch
        %244 = sbr.rel (%p242) target = $region40
      $region39: #{recognition_forward.1} parent=5 // pred_region
        // Predicated region
        $region41: #{recognition_forward.1} parent=39 // pred_check
          %p245 = pneg %p48
        $region42: #{recognition_forward.1} parent=39 // pred_check_branch
          %247 = sbr.rel (%p245) target = $region44
        $region43: #{recognition_forward.1} parent=39 // pred_region
          %p248 = scmp.lt.s32.totalorder %s23, 1
          %s249 = scalar_select %p248, %s23, 1
          %s250 = smul.addr %s249, 3
          %s251 = smul.addr %s250, 8
          %s252 = scalar_lea.vmem %s0, %s251
        $region44: #{recognition_forward.1} parent=39 // pred_fallthru
          _
      $region40: #{recognition_forward.1} parent=5 // pred_fallthru
        _
      %p253 = scmp.le.s32.totalorder 1, %s16
      %p254 = scmp.lt.s32.totalorder %s16, 3
      %p255 = pnand %p253, %p254
      %p256 = pneg %p255
      // Predicated region
      $region45: #{recognition_forward.1} parent=5 // pred_check
        _
      $region46: #{recognition_forward.1} parent=5 // pred_check_branch
        %258 = sbr.rel (%p255) target = $region48
      $region47: #{recognition_forward.1} parent=5 // pred_region
        %s259 = ssub.s32 %s16, 1
        %p260 = scmp.lt.s32.totalorder %s25, 1
        %s261 = scalar_select %p260, %s25, 1
        %s262 = smul.addr %s261, 3
        %s263 = smul.addr %s262, 8
        %s264 = scalar_lea.vmem %s0, %s263
        %p265 = pneg %p54
        %p266 = pneg %p51
        %p267 = pneg %p75
        %p268 = pneg %p72
        %p269 = pneg %p96
        %p270 = pneg %p93
        %p271 = pneg %p117
        %p272 = pneg %p114
        %p273 = pneg %p138
        %p274 = pneg %p135
        %p275 = pneg %p159
        %p276 = pneg %p156
        %p277 = pneg %p180
        %p278 = pneg %p177
        %p279 = pneg %p208
        %p280 = pneg %p205
        %s281 = sand.u32 %s195, 1
        %s282 = scalar_lea.sflag [#allocation3], %s281
        %s283 = sand.u32 %s195, 1
        %s284 = smul.addr %s283, 16
        %s285 = scalar_lea.vmem [#allocation2], %s284
        %p286 = scmp.lt.s32.totalorder %s25, 1
        %s287 = scalar_select %p286, %s25, 1
        %s288 = smul.addr %s287, 3
        %s289 = smul.addr %s288, 8
        %s290 = scalar_lea.vmem %s0, %s289
        %s291 = smul.u32 2, %s26
        %s292 = smul.u32 %s26, 16
        %s293 = scalar_lea.vmem %s290, %s292
        %v294 = vld [vmem:[%s293] sm:$0xff]
        %v295 = vld [vmem:[%s293 + $0x8] sm:$0xff]
        %v296 = vld [vmem:[%s1] sm:$0xff]
        %v297 = vld [vmem:[%s1 + $0x8] sm:$0xff]
        %v298 = vld [vmem:[%s1 + $0x10] sm:$0xff]
        %v299 = vld [vmem:[%s1 + $0x18] sm:$0xff]
        %v300 = vld [vmem:[%s1 + $0x20] sm:$0xff]
        %v301 = vld [vmem:[%s1 + $0x28] sm:$0xff]
        %v302 = vld [vmem:[%s1 + $0x30] sm:$0xff]
        %v303 = vld [vmem:[%s1 + $0x38] sm:$0xff]
        %v304 = vld [vmem:[%s1 + $0x40] sm:$0xff]
        %v305 = vld [vmem:[%s1 + $0x48] sm:$0xff]
        %v306 = vld [vmem:[%s1 + $0x50] sm:$0xff]
        %v307 = vld [vmem:[%s1 + $0x58] sm:$0xff]
        %v308 = vld [vmem:[%s1 + $0x60] sm:$0xff]
        %v309 = vld [vmem:[%s1 + $0x68] sm:$0xff]
        %v310 = vld [vmem:[%s1 + $0x70] sm:$0xff]
        %v311 = vld [vmem:[%s1 + $0x78] sm:$0xff]
        %v312 = vld [vmem:[%s1 + $0x80] sm:$0xff]
        %v313 = vld [vmem:[%s1 + $0x88] sm:$0xff]
        %v314 = vld [vmem:[%s1 + $0x90] sm:$0xff]
        %v315 = vld [vmem:[%s1 + $0x98] sm:$0xff]
        %v316 = vld [vmem:[%s1 + $0xa0] sm:$0xff]
        %v317 = vld [vmem:[%s1 + $0xa8] sm:$0xff]
        %v318 = vld [vmem:[%s1 + $0xb0] sm:$0xff]
        %v319 = vld [vmem:[%s1 + $0xb8] sm:$0xff]
        %v320 = vld [vmem:[%s1 + $0xc0] sm:$0xff]
        %v321 = vld [vmem:[%s1 + $0xc8] sm:$0xff]
        %v322 = vld [vmem:[%s1 + $0xd0] sm:$0xff]
        %s323 = sadd.s32 %s292, 1
        %s324 = scalar_lea.vmem %s290, %s323
        %v325 = vld [vmem:[%s324] sm:$0xff]
        %v326 = vld [vmem:[%s324 + $0x8] sm:$0xff]
        %s327 = scalar_lea.vmem %s1, 216
        %v328 = vld [vmem:[%s327] sm:$0xff]
        %v329 = vld [vmem:[%s327 + $0x8] sm:$0xff]
        %v330 = vld [vmem:[%s327 + $0x10] sm:$0xff]
        %v331 = vld [vmem:[%s327 + $0x18] sm:$0xff]
        %v332 = vld [vmem:[%s327 + $0x20] sm:$0xff]
        %v333 = vld [vmem:[%s327 + $0x28] sm:$0xff]
        %v334 = vld [vmem:[%s327 + $0x30] sm:$0xff]
        %v335 = vld [vmem:[%s327 + $0x38] sm:$0xff]
        %v336 = vld [vmem:[%s327 + $0x40] sm:$0xff]
        %v337 = vld [vmem:[%s327 + $0x48] sm:$0xff]
        %v338 = vld [vmem:[%s327 + $0x50] sm:$0xff]
        %v339 = vld [vmem:[%s327 + $0x58] sm:$0xff]
        %v340 = vld [vmem:[%s327 + $0x60] sm:$0xff]
        %v341 = vld [vmem:[%s327 + $0x68] sm:$0xff]
        %v342 = vld [vmem:[%s327 + $0x70] sm:$0xff]
        %v343 = vld [vmem:[%s327 + $0x78] sm:$0xff]
        %v344 = vld [vmem:[%s327 + $0x80] sm:$0xff]
        %v345 = vld [vmem:[%s327 + $0x88] sm:$0xff]
        %v346 = vld [vmem:[%s327 + $0x90] sm:$0xff]
        %v347 = vld [vmem:[%s327 + $0x98] sm:$0xff]
        %v348 = vld [vmem:[%s327 + $0xa0] sm:$0xff]
        %v349 = vld [vmem:[%s327 + $0xa8] sm:$0xff]
        %v350 = vld [vmem:[%s327 + $0xb0] sm:$0xff]
        %v351 = vld [vmem:[%s327 + $0xb8] sm:$0xff]
        %v352 = vld [vmem:[%s327 + $0xc0] sm:$0xff]
        %v353 = vld [vmem:[%s327 + $0xc8] sm:$0xff]
        %v354 = vld [vmem:[%s327 + $0xd0] sm:$0xff]
        %vm355 = vcmask 588800
        %v357 = vsel %vm355, %v325, 0
        %v360 = vsel %vm355, %v326, 0
        %362 = vmatprep.subr.mxu0 %v329
        %363 = vmatpush1.msra.mxu0 %v328
        %364 = vmatprep.subr.mxu0 %v332
        %365 = vmatpush1.msra.mxu0 %v331
        %366 = vmatprep.subr.mxu0 %v335
        %367 = vmatpush1.msra.mxu0 %v334
        %368 = vmatprep.subr.mxu0 %v338
        %369 = vmatpush1.msra.mxu0 %v337
        %370 = vmatprep.subr.mxu0 %v341
        %371 = vmatpush1.msra.mxu0 %v340
        %372 = vmatprep.subr.mxu0 %v344
        %373 = vmatpush1.msra.mxu0 %v343
        %374 = vmatprep.subr.mxu0 %v347
        %375 = vmatpush1.msra.mxu0 %v346
        %376 = vmatprep.subr.mxu0 %v350
        %377 = vmatpush1.msra.mxu0 %v349
        %378 = vmatprep.subr.mxu0 %v353
        %379 = vmatpush1.msra.mxu0 %v352
        %380 = vmatprep.subr.mxu0 0.0
        %381 = vmatpush1.msra.mxu0 0.0
        %382 = vmatprep.subr.mxu0 0.0
        %383 = vmatpush1.msra.mxu0 0.0
        %384 = vmatprep.subr.mxu0 0.0
        %385 = vmatpush1.msra.mxu0 0.0
        %386 = vmatprep.subr.mxu0 0.0
        %387 = vmatpush1.msra.mxu0 0.0
        %388 = vmatprep.subr.mxu0 0.0
        %389 = vmatpush1.msra.mxu0 0.0
        %390 = vmatprep.subr.mxu0 0.0
        %391 = vmatpush1.msra.mxu0 0.0
        %392 = vmatprep.subr.mxu0 0.0
        %393 = vmatpush1.msra.mxu0 0.0
        %394 = vmatprep.subr.mxu0 0.0
        %395 = vmatpush1.msra.mxu0 0.0
        %396 = vmatprep.subr.mxu0 0.0
        %397 = vmatpush1.msra.mxu0 0.0
        %398 = vmatprep.subr.mxu0 0.0
        %399 = vmatpush1.msra.mxu0 0.0
        %400 = vmatprep.subr.mxu0 0.0
        %401 = vmatpush1.msra.mxu0 0.0
        %402 = vmatprep.subr.mxu0 0.0
        %403 = vmatpush1.msra.mxu0 0.0
        %404 = vmatprep.subr.mxu0 0.0
        %405 = vmatpush1.msra.mxu0 0.0
        %406 = vmatprep.subr.mxu0 0.0
        %407 = vmatpush1.msra.mxu0 0.0
        %408 = vmatprep.subr.mxu0 0.0
        %409 = vmatpush1.msra.mxu0 0.0
        %410 = vmatprep.subr.mxu0 0.0
        %411 = vmatpush1.msra.mxu0 0.0
        %412 = vmatprep.subr.mxu0 0.0
        %413 = vmatpush1.msra.mxu0 0.0
        %414 = vmatprep.subr.mxu0 0.0
        %415 = vmatpush1.msra.mxu0 0.0
        %416 = vmatprep.subr.mxu0 0.0
        %417 = vmatpush1.msra.mxu0 0.0
        %418 = vmatprep.subr.mxu0 0.0
        %419 = vmatpush1.msra.mxu0 0.0
        %420 = vmatprep.subr.mxu0 0.0
        %421 = vmatpush1.msra.mxu0 0.0
        %422 = vmatprep.subr.mxu0 0.0
        %423 = vmatpush1.msra.mxu0 0.0
        %424 = vmatprep.subr.mxu0 0.0
        %425 = vmatpush1.msra.mxu0 0.0
        %426 = vmatprep.mubr.f32.mxu0 0.0
        %427 = vmatmul.mubr.f32.gmra.mrb[0].mxu0 %v357
        %v428 = vpop.f32.mrb[0].mxu0
        %v429 = vadd.f32 0.0, %v428
        %v430 = vpop.f32.mrb[0].mxu0
        %v431 = vadd.f32 0.0, %v430
        %432 = vmatprep.mubr.f32.mxu0 0.0
        %433 = vmatmul.mubr.f32.gmra.mrb[0].mxu0 %v360
        %v434 = vpop.f32.mrb[0].mxu0
        %v435 = vadd.f32 0.0, %v434
        %v436 = vpop.f32.mrb[0].mxu0
        %v437 = vadd.f32 0.0, %v436
        %438 = vdwg.mxu0
        %439 = vmatprep.subr.mxu0 0.0
        %440 = vmatpush1.msra.mxu0 %v330
        %441 = vmatprep.subr.mxu0 0.0
        %442 = vmatpush1.msra.mxu0 %v333
        %443 = vmatprep.subr.mxu0 0.0
        %444 = vmatpush1.msra.mxu0 %v336
        %445 = vmatprep.subr.mxu0 0.0
        %446 = vmatpush1.msra.mxu0 %v339
        %447 = vmatprep.subr.mxu0 0.0
        %448 = vmatpush1.msra.mxu0 %v342
        %449 = vmatprep.subr.mxu0 0.0
        %450 = vmatpush1.msra.mxu0 %v345
        %451 = vmatprep.subr.mxu0 0.0
        %452 = vmatpush1.msra.mxu0 %v348
        %453 = vmatprep.subr.mxu0 0.0
        %454 = vmatpush1.msra.mxu0 %v351
        %455 = vmatprep.subr.mxu0 0.0
        %456 = vmatpush1.msra.mxu0 %v354
        %457 = vmatprep.subr.mxu0 0.0
        %458 = vmatpush1.msra.mxu0 0.0
        %459 = vmatprep.subr.mxu0 0.0
        %460 = vmatpush1.msra.mxu0 0.0
        %461 = vmatprep.subr.mxu0 0.0
        %462 = vmatpush1.msra.mxu0 0.0
        %463 = vmatprep.subr.mxu0 0.0
        %464 = vmatpush1.msra.mxu0 0.0
        %465 = vmatprep.subr.mxu0 0.0
        %466 = vmatpush1.msra.mxu0 0.0
        %467 = vmatprep.subr.mxu0 0.0
        %468 = vmatpush1.msra.mxu0 0.0
        %469 = vmatprep.subr.mxu0 0.0
        %470 = vmatpush1.msra.mxu0 0.0
        %471 = vmatprep.subr.mxu0 0.0
        %472 = vmatpush1.msra.mxu0 0.0
        %473 = vmatprep.subr.mxu0 0.0
        %474 = vmatpush1.msra.mxu0 0.0
        %475 = vmatprep.subr.mxu0 0.0
        %476 = vmatpush1.msra.mxu0 0.0
        %477 = vmatprep.subr.mxu0 0.0
        %478 = vmatpush1.msra.mxu0 0.0
        %479 = vmatprep.subr.mxu0 0.0
        %480 = vmatpush1.msra.mxu0 0.0
        %481 = vmatprep.subr.mxu0 0.0
        %482 = vmatpush1.msra.mxu0 0.0
        %483 = vmatprep.subr.mxu0 0.0
        %484 = vmatpush1.msra.mxu0 0.0
        %485 = vmatprep.subr.mxu0 0.0
        %486 = vmatpush1.msra.mxu0 0.0
        %487 = vmatprep.subr.mxu0 0.0
        %488 = vmatpush1.msra.mxu0 0.0
        %489 = vmatprep.subr.mxu0 0.0
        %490 = vmatpush1.msra.mxu0 0.0
        %491 = vmatprep.subr.mxu0 0.0
        %492 = vmatpush1.msra.mxu0 0.0
        %493 = vmatprep.subr.mxu0 0.0
        %494 = vmatpush1.msra.mxu0 0.0
        %495 = vmatprep.subr.mxu0 0.0
        %496 = vmatpush1.msra.mxu0 0.0
        %497 = vmatprep.subr.mxu0 0.0
        %498 = vmatpush1.msra.mxu0 0.0
        %499 = vmatprep.subr.mxu0 0.0
        %500 = vmatpush1.msra.mxu0 0.0
        %501 = vmatprep.subr.mxu0 0.0
        %502 = vmatpush1.msra.mxu0 0.0
        %503 = vmatprep.mubr.f32.mxu0 0.0
        %504 = vmatmul.mubr.f32.gmra.mrb[0].mxu0 %v357
        %v505 = vpop.f32.mrb[0].mxu0
        %v506 = vadd.f32 0.0, %v505
        %v507 = vpop.f32.mrb[0].mxu0
        %508 = vmatprep.mubr.f32.mxu0 0.0
        %509 = vmatmul.mubr.f32.gmra.mrb[0].mxu0 %v360
        %v510 = vpop.f32.mrb[0].mxu0
        %v511 = vadd.f32 0.0, %v510
        %v512 = vpop.f32.mrb[0].mxu0
        %513 = vdwg.mxu0
        %v515 = vsel %vm355, %v294, 0
        %v518 = vsel %vm355, %v295, 0
        %520 = vmatprep.subr.mxu0 %v297
        %521 = vmatpush1.msra.mxu0 %v296
        %522 = vmatprep.subr.mxu0 %v300
        %523 = vmatpush1.msra.mxu0 %v299
        %524 = vmatprep.subr.mxu0 %v303
        %525 = vmatpush1.msra.mxu0 %v302
        %526 = vmatprep.subr.mxu0 %v306
        %527 = vmatpush1.msra.mxu0 %v305
        %528 = vmatprep.subr.mxu0 %v309
        %529 = vmatpush1.msra.mxu0 %v308
        %530 = vmatprep.subr.mxu0 %v312
        %531 = vmatpush1.msra.mxu0 %v311
        %532 = vmatprep.subr.mxu0 %v315
        %533 = vmatpush1.msra.mxu0 %v314
        %534 = vmatprep.subr.mxu0 %v318
        %535 = vmatpush1.msra.mxu0 %v317
        %536 = vmatprep.subr.mxu0 %v321
        %537 = vmatpush1.msra.mxu0 %v320
        %538 = vmatprep.subr.mxu0 0.0
        %539 = vmatpush1.msra.mxu0 0.0
        %540 = vmatprep.subr.mxu0 0.0
        %541 = vmatpush1.msra.mxu0 0.0
        %542 = vmatprep.subr.mxu0 0.0
        %543 = vmatpush1.msra.mxu0 0.0
        %544 = vmatprep.subr.mxu0 0.0
        %545 = vmatpush1.msra.mxu0 0.0
        %546 = vmatprep.subr.mxu0 0.0
        %547 = vmatpush1.msra.mxu0 0.0
        %548 = vmatprep.subr.mxu0 0.0
        %549 = vmatpush1.msra.mxu0 0.0
        %550 = vmatprep.subr.mxu0 0.0
        %551 = vmatpush1.msra.mxu0 0.0
        %552 = vmatprep.subr.mxu0 0.0
        %553 = vmatpush1.msra.mxu0 0.0
        %554 = vmatprep.subr.mxu0 0.0
        %555 = vmatpush1.msra.mxu0 0.0
        %556 = vmatprep.subr.mxu0 0.0
        %557 = vmatpush1.msra.mxu0 0.0
        %558 = vmatprep.subr.mxu0 0.0
        %559 = vmatpush1.msra.mxu0 0.0
        %560 = vmatprep.subr.mxu0 0.0
        %561 = vmatpush1.msra.mxu0 0.0
        %562 = vmatprep.subr.mxu0 0.0
        %563 = vmatpush1.msra.mxu0 0.0
        %564 = vmatprep.subr.mxu0 0.0
        %565 = vmatpush1.msra.mxu0 0.0
        %566 = vmatprep.subr.mxu0 0.0
        %567 = vmatpush1.msra.mxu0 0.0
        %568 = vmatprep.subr.mxu0 0.0
        %569 = vmatpush1.msra.mxu0 0.0
        %570 = vmatprep.subr.mxu0 0.0
        %571 = vmatpush1.msra.mxu0 0.0
        %572 = vmatprep.subr.mxu0 0.0
        %573 = vmatpush1.msra.mxu0 0.0
        %574 = vmatprep.subr.mxu0 0.0
        %575 = vmatpush1.msra.mxu0 0.0
        %576 = vmatprep.subr.mxu0 0.0
        %577 = vmatpush1.msra.mxu0 0.0
        %578 = vmatprep.subr.mxu0 0.0
        %579 = vmatpush1.msra.mxu0 0.0
        %580 = vmatprep.subr.mxu0 0.0
        %581 = vmatpush1.msra.mxu0 0.0
        %582 = vmatprep.subr.mxu0 0.0
        %583 = vmatpush1.msra.mxu0 0.0
        %584 = vmatprep.mubr.f32.mxu0 0.0
        %585 = vmatmul.mubr.f32.gmra.mrb[0].mxu0 %v515
        %v586 = vpop.f32.mrb[0].mxu0
        %v587 = vadd.f32 %v429, %v586
        %v588 = vpop.f32.mrb[0].mxu0
        %v589 = vadd.f32 %v431, %v588
        %590 = vmatprep.mubr.f32.mxu0 0.0
        %591 = vmatmul.mubr.f32.gmra.mrb[0].mxu0 %v518
        %v592 = vpop.f32.mrb[0].mxu0
        %v593 = vadd.f32 %v435, %v592
        %v594 = vpop.f32.mrb[0].mxu0
        %v595 = vadd.f32 %v437, %v594
        %596 = vdwg.mxu0
        %597 = vmatprep.subr.mxu0 0.0
        %598 = vmatpush1.msra.mxu0 %v298
        %599 = vmatprep.subr.mxu0 0.0
        %600 = vmatpush1.msra.mxu0 %v301
        %601 = vmatprep.subr.mxu0 0.0
        %602 = vmatpush1.msra.mxu0 %v304
        %603 = vmatprep.subr.mxu0 0.0
        %604 = vmatpush1.msra.mxu0 %v307
        %605 = vmatprep.subr.mxu0 0.0
        %606 = vmatpush1.msra.mxu0 %v310
        %607 = vmatprep.subr.mxu0 0.0
        %608 = vmatpush1.msra.mxu0 %v313
        %609 = vmatprep.subr.mxu0 0.0
        %610 = vmatpush1.msra.mxu0 %v316
        %611 = vmatprep.subr.mxu0 0.0
        %612 = vmatpush1.msra.mxu0 %v319
        %613 = vmatprep.subr.mxu0 0.0
        %614 = vmatpush1.msra.mxu0 %v322
        %615 = vmatprep.subr.mxu0 0.0
        %616 = vmatpush1.msra.mxu0 0.0
        %617 = vmatprep.subr.mxu0 0.0
        %618 = vmatpush1.msra.mxu0 0.0
        %619 = vmatprep.subr.mxu0 0.0
        %620 = vmatpush1.msra.mxu0 0.0
        %621 = vmatprep.subr.mxu0 0.0
        %622 = vmatpush1.msra.mxu0 0.0
        %623 = vmatprep.subr.mxu0 0.0
        %624 = vmatpush1.msra.mxu0 0.0
        %625 = vmatprep.subr.mxu0 0.0
        %626 = vmatpush1.msra.mxu0 0.0
        %627 = vmatprep.subr.mxu0 0.0
        %628 = vmatpush1.msra.mxu0 0.0
        %629 = vmatprep.subr.mxu0 0.0
        %630 = vmatpush1.msra.mxu0 0.0
        %631 = vmatprep.subr.mxu0 0.0
        %632 = vmatpush1.msra.mxu0 0.0
        %633 = vmatprep.subr.mxu0 0.0
        %634 = vmatpush1.msra.mxu0 0.0
        %635 = vmatprep.subr.mxu0 0.0
        %636 = vmatpush1.msra.mxu0 0.0
        %637 = vmatprep.subr.mxu0 0.0
        %638 = vmatpush1.msra.mxu0 0.0
        %639 = vmatprep.subr.mxu0 0.0
        %640 = vmatpush1.msra.mxu0 0.0
        %641 = vmatprep.subr.mxu0 0.0
        %642 = vmatpush1.msra.mxu0 0.0
        %643 = vmatprep.subr.mxu0 0.0
        %644 = vmatpush1.msra.mxu0 0.0
        %645 = vmatprep.subr.mxu0 0.0
        %646 = vmatpush1.msra.mxu0 0.0
        %647 = vmatprep.subr.mxu0 0.0
        %648 = vmatpush1.msra.mxu0 0.0
        %649 = vmatprep.subr.mxu0 0.0
        %650 = vmatpush1.msra.mxu0 0.0
        %651 = vmatprep.subr.mxu0 0.0
        %652 = vmatpush1.msra.mxu0 0.0
        %653 = vmatprep.subr.mxu0 0.0
        %654 = vmatpush1.msra.mxu0 0.0
        %655 = vmatprep.subr.mxu0 0.0
        %656 = vmatpush1.msra.mxu0 0.0
        %657 = vmatprep.subr.mxu0 0.0
        %658 = vmatpush1.msra.mxu0 0.0
        %659 = vmatprep.subr.mxu0 0.0
        %660 = vmatpush1.msra.mxu0 0.0
        %661 = vmatprep.mubr.f32.mxu0 0.0
        %662 = vmatmul.mubr.f32.gmra.mrb[0].mxu0 %v515
        %v663 = vpop.f32.mrb[0].mxu0
        %v664 = vadd.f32 %v506, %v663
        %v665 = vpop.f32.mrb[0].mxu0
        %666 = vmatprep.mubr.f32.mxu0 0.0
        %667 = vmatmul.mubr.f32.gmra.mrb[0].mxu0 %v518
        %v668 = vpop.f32.mrb[0].mxu0
        %v669 = vadd.f32 %v511, %v668
        %v670 = vpop.f32.mrb[0].mxu0
        %671 = vdwg.mxu0
        %s672 = sadd.s32 %s292, 2
        %s673 = scalar_lea.vmem %s290, %s672
        %v674 = vld [vmem:[%s673] sm:$0xff]
        %v675 = vld [vmem:[%s673 + $0x8] sm:$0xff]
        %s676 = scalar_lea.vmem %s1, 432
        %v677 = vld [vmem:[%s676] sm:$0xff]
        %v678 = vld [vmem:[%s676 + $0x8] sm:$0xff]
        %v679 = vld [vmem:[%s676 + $0x10] sm:$0xff]
        %v680 = vld [vmem:[%s676 + $0x18] sm:$0xff]
        %v681 = vld [vmem:[%s676 + $0x20] sm:$0xff]
        %v682 = vld [vmem:[%s676 + $0x28] sm:$0xff]
        %v683 = vld [vmem:[%s676 + $0x30] sm:$0xff]
        %v684 = vld [vmem:[%s676 + $0x38] sm:$0xff]
        %v685 = vld [vmem:[%s676 + $0x40] sm:$0xff]
        %v686 = vld [vmem:[%s676 + $0x48] sm:$0xff]
        %v687 = vld [vmem:[%s676 + $0x50] sm:$0xff]
        %v688 = vld [vmem:[%s676 + $0x58] sm:$0xff]
        %v689 = vld [vmem:[%s676 + $0x60] sm:$0xff]
        %v690 = vld [vmem:[%s676 + $0x68] sm:$0xff]
        %v691 = vld [vmem:[%s676 + $0x70] sm:$0xff]
        %v692 = vld [vmem:[%s676 + $0x78] sm:$0xff]
        %v693 = vld [vmem:[%s676 + $0x80] sm:$0xff]
        %v694 = vld [vmem:[%s676 + $0x88] sm:$0xff]
        %v695 = vld [vmem:[%s676 + $0x90] sm:$0xff]
        %v696 = vld [vmem:[%s676 + $0x98] sm:$0xff]
        %v697 = vld [vmem:[%s676 + $0xa0] sm:$0xff]
        %v698 = vld [vmem:[%s676 + $0xa8] sm:$0xff]
        %v699 = vld [vmem:[%s676 + $0xb0] sm:$0xff]
        %v700 = vld [vmem:[%s676 + $0xb8] sm:$0xff]
        %v701 = vld [vmem:[%s676 + $0xc0] sm:$0xff]
        %v702 = vld [vmem:[%s676 + $0xc8] sm:$0xff]
        %v703 = vld [vmem:[%s676 + $0xd0] sm:$0xff]
        %v705 = vsel %vm355, %v674, 0
        %v708 = vsel %vm355, %v675, 0
        %710 = vmatprep.subr.mxu0 %v678
        %711 = vmatpush1.msra.mxu0 %v677
        %712 = vmatprep.subr.mxu0 %v681
        %713 = vmatpush1.msra.mxu0 %v680
        %714 = vmatprep.subr.mxu0 %v684
        %715 = vmatpush1.msra.mxu0 %v683
        %716 = vmatprep.subr.mxu0 %v687
        %717 = vmatpush1.msra.mxu0 %v686
        %718 = vmatprep.subr.mxu0 %v690
        %719 = vmatpush1.msra.mxu0 %v689
        %720 = vmatprep.subr.mxu0 %v693
        %721 = vmatpush1.msra.mxu0 %v692
        %722 = vmatprep.subr.mxu0 %v696
        %723 = vmatpush1.msra.mxu0 %v695
        %724 = vmatprep.subr.mxu0 %v699
        %725 = vmatpush1.msra.mxu0 %v698
        %726 = vmatprep.subr.mxu0 %v702
        %727 = vmatpush1.msra.mxu0 %v701
        %728 = vmatprep.subr.mxu0 0.0
        %729 = vmatpush1.msra.mxu0 0.0
        %730 = vmatprep.subr.mxu0 0.0
        %731 = vmatpush1.msra.mxu0 0.0
        %732 = vmatprep.subr.mxu0 0.0
        %733 = vmatpush1.msra.mxu0 0.0
        %734 = vmatprep.subr.mxu0 0.0
        %735 = vmatpush1.msra.mxu0 0.0
        %736 = vmatprep.subr.mxu0 0.0
        %737 = vmatpush1.msra.mxu0 0.0
        %738 = vmatprep.subr.mxu0 0.0
        %739 = vmatpush1.msra.mxu0 0.0
        %740 = vmatprep.subr.mxu0 0.0
        %741 = vmatpush1.msra.mxu0 0.0
        %742 = vmatprep.subr.mxu0 0.0
        %743 = vmatpush1.msra.mxu0 0.0
        %744 = vmatprep.subr.mxu0 0.0
        %745 = vmatpush1.msra.mxu0 0.0
        %746 = vmatprep.subr.mxu0 0.0
        %747 = vmatpush1.msra.mxu0 0.0
        %748 = vmatprep.subr.mxu0 0.0
        %749 = vmatpush1.msra.mxu0 0.0
        %750 = vmatprep.subr.mxu0 0.0
        %751 = vmatpush1.msra.mxu0 0.0
        %752 = vmatprep.subr.mxu0 0.0
        %753 = vmatpush1.msra.mxu0 0.0
        %754 = vmatprep.subr.mxu0 0.0
        %755 = vmatpush1.msra.mxu0 0.0
        %756 = vmatprep.subr.mxu0 0.0
        %757 = vmatpush1.msra.mxu0 0.0
        %758 = vmatprep.subr.mxu0 0.0
        %759 = vmatpush1.msra.mxu0 0.0
        %760 = vmatprep.subr.mxu0 0.0
        %761 = vmatpush1.msra.mxu0 0.0
        %762 = vmatprep.subr.mxu0 0.0
        %763 = vmatpush1.msra.mxu0 0.0
        %764 = vmatprep.subr.mxu0 0.0
        %765 = vmatpush1.msra.mxu0 0.0
        %766 = vmatprep.subr.mxu0 0.0
        %767 = vmatpush1.msra.mxu0 0.0
        %768 = vmatprep.subr.mxu0 0.0
        %769 = vmatpush1.msra.mxu0 0.0
        %770 = vmatprep.subr.mxu0 0.0
        %771 = vmatpush1.msra.mxu0 0.0
        %772 = vmatprep.subr.mxu0 0.0
        %773 = vmatpush1.msra.mxu0 0.0
        %774 = vmatprep.mubr.f32.mxu0 0.0
        %775 = vmatmul.mubr.f32.gmra.mrb[0].mxu0 %v705
        %v776 = vpop.f32.mrb[0].mxu0
        %v777 = vadd.f32 0.0, %v776
        %v778 = vpop.f32.mrb[0].mxu0
        %v779 = vadd.f32 0.0, %v778
        %780 = vmatprep.mubr.f32.mxu0 0.0
        %781 = vmatmul.mubr.f32.gmra.mrb[0].mxu0 %v708
        %v782 = vpop.f32.mrb[0].mxu0
        %v783 = vadd.f32 0.0, %v782
        %v784 = vpop.f32.mrb[0].mxu0
        %v785 = vadd.f32 0.0, %v784
        %786 = vdwg.mxu0
        %787 = vmatprep.subr.mxu0 0.0
        %788 = vmatpush1.msra.mxu0 %v679
        %789 = vmatprep.subr.mxu0 0.0
        %790 = vmatpush1.msra.mxu0 %v682
        %791 = vmatprep.subr.mxu0 0.0
        %792 = vmatpush1.msra.mxu0 %v685
        %793 = vmatprep.subr.mxu0 0.0
        %794 = vmatpush1.msra.mxu0 %v688
        %795 = vmatprep.subr.mxu0 0.0
        %796 = vmatpush1.msra.mxu0 %v691
        %797 = vmatprep.subr.mxu0 0.0
        %798 = vmatpush1.msra.mxu0 %v694
        %799 = vmatprep.subr.mxu0 0.0
        %800 = vmatpush1.msra.mxu0 %v697
        %801 = vmatprep.subr.mxu0 0.0
        %802 = vmatpush1.msra.mxu0 %v700
        %803 = vmatprep.subr.mxu0 0.0
        %804 = vmatpush1.msra.mxu0 %v703
        %805 = vmatprep.subr.mxu0 0.0
        %806 = vmatpush1.msra.mxu0 0.0
        %807 = vmatprep.subr.mxu0 0.0
        %808 = vmatpush1.msra.mxu0 0.0
        %809 = vmatprep.subr.mxu0 0.0
        %810 = vmatpush1.msra.mxu0 0.0
        %811 = vmatprep.subr.mxu0 0.0
        %812 = vmatpush1.msra.mxu0 0.0
        %813 = vmatprep.subr.mxu0 0.0
        %814 = vmatpush1.msra.mxu0 0.0
        %815 = vmatprep.subr.mxu0 0.0
        %816 = vmatpush1.msra.mxu0 0.0
        %817 = vmatprep.subr.mxu0 0.0
        %818 = vmatpush1.msra.mxu0 0.0
        %819 = vmatprep.subr.mxu0 0.0
        %820 = vmatpush1.msra.mxu0 0.0
        %821 = vmatprep.subr.mxu0 0.0
        %822 = vmatpush1.msra.mxu0 0.0
        %823 = vmatprep.subr.mxu0 0.0
        %824 = vmatpush1.msra.mxu0 0.0
        %825 = vmatprep.subr.mxu0 0.0
        %826 = vmatpush1.msra.mxu0 0.0
        %827 = vmatprep.subr.mxu0 0.0
        %828 = vmatpush1.msra.mxu0 0.0
        %829 = vmatprep.subr.mxu0 0.0
        %830 = vmatpush1.msra.mxu0 0.0
        %831 = vmatprep.subr.mxu0 0.0
        %832 = vmatpush1.msra.mxu0 0.0
        %833 = vmatprep.subr.mxu0 0.0
        %834 = vmatpush1.msra.mxu0 0.0
        %835 = vmatprep.subr.mxu0 0.0
        %836 = vmatpush1.msra.mxu0 0.0
        %837 = vmatprep.subr.mxu0 0.0
        %838 = vmatpush1.msra.mxu0 0.0
        %839 = vmatprep.subr.mxu0 0.0
        %840 = vmatpush1.msra.mxu0 0.0
        %841 = vmatprep.subr.mxu0 0.0
        %842 = vmatpush1.msra.mxu0 0.0
        %843 = vmatprep.subr.mxu0 0.0
        %844 = vmatpush1.msra.mxu0 0.0
        %845 = vmatprep.subr.mxu0 0.0
        %846 = vmatpush1.msra.mxu0 0.0
        %847 = vmatprep.subr.mxu0 0.0
        %848 = vmatpush1.msra.mxu0 0.0
        %849 = vmatprep.subr.mxu0 0.0
        %850 = vmatpush1.msra.mxu0 0.0
        %851 = vmatprep.mubr.f32.mxu0 0.0
        %852 = vmatmul.mubr.f32.gmra.mrb[0].mxu0 %v705
        %v853 = vpop.f32.mrb[0].mxu0
        %v854 = vadd.f32 0.0, %v853
        %v855 = vpop.f32.mrb[0].mxu0
        %856 = vmatprep.mubr.f32.mxu0 0.0
        %857 = vmatmul.mubr.f32.gmra.mrb[0].mxu0 %v708
        %v858 = vpop.f32.mrb[0].mxu0
        %v859 = vadd.f32 0.0, %v858
        %v860 = vpop.f32.mrb[0].mxu0
        %861 = vdwg.mxu0
        %v862 = vadd.f32 %v587, %v777
        %v863 = vadd.f32 %v589, %v779
        %v864 = vadd.f32 %v664, %v854
        %v865 = vadd.f32 %v593, %v783
        %v866 = vadd.f32 %v595, %v785
        %v867 = vadd.f32 %v669, %v859
        %v868 = vld [vmem:[%s2] sm:$0x7]
        %v870 = vlaneseq
        %v871 = vshrl.u32 %v870, 7
        %v872 = vsub.s32 0, %v871
        %v873 = vrot.slane %v868, %v872
        %v874 = vlaneseq
        %v875 = vshrl.u32 %v874, 7
        %v876 = vsub.s32 1, %v875
        %v877 = vrot.slane %v868, %v876
        %v878 = vlaneseq
        %v879 = vshrl.u32 %v878, 7
        %v880 = vsub.s32 2, %v879
        %v881 = vrot.slane %v868, %v880
        %v885 = vadd.f32 %v862, %v873
        %v886 = vadd.f32 %v863, %v877
        %v887 = vadd.f32 %v864, %v881
        %v888 = vadd.f32 %v865, %v873
        %v889 = vadd.f32 %v866, %v877
        %v890 = vadd.f32 %v867, %v881
        %v891 = vmax.f32 %v885, 0.0
        %v892 = vmax.f32 %v886, 0.0
        %v893 = vmax.f32 %v887, 0.0
        %v894 = vmax.f32 %v888, 0.0
        %v895 = vmax.f32 %v889, 0.0
        %v896 = vmax.f32 %v890, 0.0
        %v897 = vld [vmem:[%s3] sm:$0xff]
        %v898 = vld [vmem:[%s3 + $0x8] sm:$0xff]
        %v899 = vld [vmem:[%s3 + $0x10] sm:$0xff]
        %v900 = vld [vmem:[%s3 + $0x18] sm:$0xff]
        %v901 = vld [vmem:[%s3 + $0x20] sm:$0xff]
        %v902 = vld [vmem:[%s3 + $0x28] sm:$0xff]
        %v903 = vld [vmem:[%s3 + $0x30] sm:$0xff]
        %v904 = vld [vmem:[%s3 + $0x38] sm:$0xff]
        %v905 = vld [vmem:[%s3 + $0x40] sm:$0xff]
        %v906 = vld [vmem:[%s3 + $0x48] sm:$0xff]
        %v907 = vld [vmem:[%s3 + $0x50] sm:$0xff]
        %v908 = vld [vmem:[%s3 + $0x58] sm:$0xff]
        %v909 = vld [vmem:[%s3 + $0x60] sm:$0xff]
        %v910 = vld [vmem:[%s3 + $0x68] sm:$0xff]
        %v911 = vld [vmem:[%s3 + $0x70] sm:$0xff]
        %v912 = vld [vmem:[%s3 + $0x78] sm:$0xff]
        %v913 = vld [vmem:[%s3 + $0x80] sm:$0xff]
        %v914 = vld [vmem:[%s3 + $0x88] sm:$0xff]
        %v915 = vld [vmem:[%s3 + $0x90] sm:$0xff]
        %v916 = vld [vmem:[%s3 + $0x98] sm:$0xff]
        %v917 = vld [vmem:[%s3 + $0xa0] sm:$0xff]
        %v918 = vld [vmem:[%s3 + $0xa8] sm:$0xff]
        %v919 = vld [vmem:[%s3 + $0xb0] sm:$0xff]
        %v920 = vld [vmem:[%s3 + $0xb8] sm:$0xff]
        %v921 = vld [vmem:[%s3 + $0xc0] sm:$0xff]
        %v922 = vld [vmem:[%s3 + $0xc8] sm:$0xff]
        %v923 = vld [vmem:[%s3 + $0xd0] sm:$0xff]
        %v924 = vld [vmem:[%s3 + $0xd8] sm:$0xff]
        %v925 = vld [vmem:[%s3 + $0xe0] sm:$0xff]
        %v926 = vld [vmem:[%s3 + $0xe8] sm:$0xff]
        %v927 = vld [vmem:[%s3 + $0xf0] sm:$0xff]
        %v928 = vld [vmem:[%s3 + $0xf8] sm:$0xff]
        %v929 = vld [vmem:[%s3 + $0x100] sm:$0xff]
        %v930 = vld [vmem:[%s3 + $0x108] sm:$0xff]
        %v931 = vld [vmem:[%s3 + $0x110] sm:$0xff]
        %v932 = vld [vmem:[%s3 + $0x118] sm:$0xff]
        %v933 = vld [vmem:[%s3 + $0x120] sm:$0xff]
        %v934 = vld [vmem:[%s3 + $0x128] sm:$0xff]
        %v935 = vld [vmem:[%s3 + $0x130] sm:$0xff]
        %v936 = vld [vmem:[%s3 + $0x138] sm:$0xff]
        %v937 = vld [vmem:[%s3 + $0x140] sm:$0xff]
        %v938 = vld [vmem:[%s3 + $0x148] sm:$0xff]
        %v939 = vld [vmem:[%s3 + $0x150] sm:$0xff]
        %v940 = vld [vmem:[%s3 + $0x158] sm:$0xff]
        %v941 = vld [vmem:[%s3 + $0x160] sm:$0xff]
        %v942 = vld [vmem:[%s3 + $0x168] sm:$0xff]
        %v943 = vld [vmem:[%s3 + $0x170] sm:$0xff]
        %v944 = vld [vmem:[%s3 + $0x178] sm:$0xff]
        %v945 = vld [vmem:[%s3 + $0x180] sm:$0xff]
        %v946 = vld [vmem:[%s3 + $0x188] sm:$0xff]
        %v947 = vld [vmem:[%s3 + $0x190] sm:$0xff]
        %v948 = vld [vmem:[%s3 + $0x198] sm:$0xff]
        %v949 = vld [vmem:[%s3 + $0x1a0] sm:$0xff]
        %v950 = vld [vmem:[%s3 + $0x1a8] sm:$0xff]
        %v951 = vld [vmem:[%s3 + $0x1b0] sm:$0xff]
        %v952 = vld [vmem:[%s3 + $0x1b8] sm:$0xff]
        %v953 = vld [vmem:[%s3 + $0x1c0] sm:$0xff]
        %v954 = vld [vmem:[%s3 + $0x1c8] sm:$0xff]
        %v955 = vld [vmem:[%s3 + $0x1d0] sm:$0xff]
        %v956 = vld [vmem:[%s3 + $0x1d8] sm:$0xff]
        %v957 = vld [vmem:[%s3 + $0x1e0] sm:$0xff]
        %v958 = vld [vmem:[%s3 + $0x1e8] sm:$0xff]
        %v959 = vld [vmem:[%s3 + $0x1f0] sm:$0xff]
        %v960 = vld [vmem:[%s3 + $0x1f8] sm:$0xff]
        %v961 = vld [vmem:[%s3 + $0x200] sm:$0xff]
        %v962 = vld [vmem:[%s3 + $0x208] sm:$0xff]
        %v963 = vld [vmem:[%s3 + $0x210] sm:$0xff]
        %v964 = vld [vmem:[%s3 + $0x218] sm:$0xff]
        %v965 = vld [vmem:[%s3 + $0x220] sm:$0xff]
        %v966 = vld [vmem:[%s3 + $0x228] sm:$0xff]
        %v967 = vld [vmem:[%s3 + $0x230] sm:$0xff]
        %v968 = vld [vmem:[%s3 + $0x238] sm:$0xff]
        %v969 = vld [vmem:[%s3 + $0x240] sm:$0xff]
        %v970 = vld [vmem:[%s3 + $0x248] sm:$0xff]
        %v971 = vld [vmem:[%s3 + $0x250] sm:$0xff]
        %v972 = vld [vmem:[%s3 + $0x258] sm:$0xff]
        %v973 = vld [vmem:[%s3 + $0x260] sm:$0xff]
        %v974 = vld [vmem:[%s3 + $0x268] sm:$0xff]
        %v975 = vld [vmem:[%s3 + $0x270] sm:$0xff]
        %v976 = vld [vmem:[%s3 + $0x278] sm:$0xff]
        %v977 = vld [vmem:[%s3 + $0x280] sm:$0xff]
        %v978 = vld [vmem:[%s3 + $0x288] sm:$0xff]
        %v979 = vld [vmem:[%s3 + $0x290] sm:$0xff]
        %v980 = vld [vmem:[%s3 + $0x298] sm:$0xff]
        %v981 = vld [vmem:[%s3 + $0x2a0] sm:$0xff]
        %v982 = vld [vmem:[%s3 + $0x2a8] sm:$0xff]
        %v983 = vld [vmem:[%s3 + $0x2b0] sm:$0xff]
        %v984 = vld [vmem:[%s3 + $0x2b8] sm:$0xff]
        %v985 = vld [vmem:[%s3 + $0x2c0] sm:$0xff]
        %v986 = vld [vmem:[%s3 + $0x2c8] sm:$0xff]
        %v987 = vld [vmem:[%s3 + $0x2d0] sm:$0xff]
        %v988 = vld [vmem:[%s3 + $0x2d8] sm:$0xff]
        %v989 = vld [vmem:[%s3 + $0x2e0] sm:$0xff]
        %v990 = vld [vmem:[%s3 + $0x2e8] sm:$0xff]
        %v991 = vld [vmem:[%s3 + $0x2f0] sm:$0xff]
        %v992 = vld [vmem:[%s3 + $0x2f8] sm:$0xff]
        %v993 = vld [vmem:[%s4] sm:$0x3]
        %v995 = vlaneseq
        %v996 = vshrl.u32 %v995, 7
        %v997 = vsub.s32 0, %v996
        %v998 = vrot.slane %v993, %v997
        %v999 = vlaneseq
        %v1000 = vshrl.u32 %v999, 7
        %v1001 = vsub.s32 1, %v1000
        %v1002 = vrot.slane %v993, %v1001
        %1005 = vmatprep.subr.mxu0 %v898
        %1006 = vmatpush1.msra.mxu0 %v897
        %1007 = vmatprep.subr.mxu0 %v900
        %1008 = vmatpush1.msra.mxu0 %v899
        %1009 = vmatprep.subr.mxu0 %v902
        %1010 = vmatpush1.msra.mxu0 %v901
        %1011 = vmatprep.subr.mxu0 %v904
        %1012 = vmatpush1.msra.mxu0 %v903
        %1013 = vmatprep.subr.mxu0 %v906
        %1014 = vmatpush1.msra.mxu0 %v905
        %1015 = vmatprep.subr.mxu0 %v908
        %1016 = vmatpush1.msra.mxu0 %v907
        %1017 = vmatprep.subr.mxu0 %v910
        %1018 = vmatpush1.msra.mxu0 %v909
        %1019 = vmatprep.subr.mxu0 %v912
        %1020 = vmatpush1.msra.mxu0 %v911
        %1021 = vmatprep.subr.mxu0 %v914
        %1022 = vmatpush1.msra.mxu0 %v913
        %1023 = vmatprep.subr.mxu0 %v916
        %1024 = vmatpush1.msra.mxu0 %v915
        %1025 = vmatprep.subr.mxu0 %v918
        %1026 = vmatpush1.msra.mxu0 %v917
        %1027 = vmatprep.subr.mxu0 %v920
        %1028 = vmatpush1.msra.mxu0 %v919
        %1029 = vmatprep.subr.mxu0 %v922
        %1030 = vmatpush1.msra.mxu0 %v921
        %1031 = vmatprep.subr.mxu0 %v924
        %1032 = vmatpush1.msra.mxu0 %v923
        %1033 = vmatprep.subr.mxu0 %v926
        %1034 = vmatpush1.msra.mxu0 %v925
        %1035 = vmatprep.subr.mxu0 %v928
        %1036 = vmatpush1.msra.mxu0 %v927
        %1037 = vmatprep.subr.mxu0 %v930
        %1038 = vmatpush1.msra.mxu0 %v929
        %1039 = vmatprep.subr.mxu0 %v932
        %1040 = vmatpush1.msra.mxu0 %v931
        %1041 = vmatprep.subr.mxu0 %v934
        %1042 = vmatpush1.msra.mxu0 %v933
        %1043 = vmatprep.subr.mxu0 %v936
        %1044 = vmatpush1.msra.mxu0 %v935
        %1045 = vmatprep.subr.mxu0 %v938
        %1046 = vmatpush1.msra.mxu0 %v937
        %1047 = vmatprep.subr.mxu0 %v940
        %1048 = vmatpush1.msra.mxu0 %v939
        %1049 = vmatprep.subr.mxu0 %v942
        %1050 = vmatpush1.msra.mxu0 %v941
        %1051 = vmatprep.subr.mxu0 %v944
        %1052 = vmatpush1.msra.mxu0 %v943
        %1053 = vmatprep.subr.mxu0 %v946
        %1054 = vmatpush1.msra.mxu0 %v945
        %1055 = vmatprep.subr.mxu0 %v948
        %1056 = vmatpush1.msra.mxu0 %v947
        %1057 = vmatprep.subr.mxu0 %v950
        %1058 = vmatpush1.msra.mxu0 %v949
        %1059 = vmatprep.subr.mxu0 %v952
        %1060 = vmatpush1.msra.mxu0 %v951
        %1061 = vmatprep.subr.mxu0 %v954
        %1062 = vmatpush1.msra.mxu0 %v953
        %1063 = vmatprep.subr.mxu0 %v956
        %1064 = vmatpush1.msra.mxu0 %v955
        %1065 = vmatprep.subr.mxu0 %v958
        %1066 = vmatpush1.msra.mxu0 %v957
        %1067 = vmatprep.subr.mxu0 %v960
        %1068 = vmatpush1.msra.mxu0 %v959
        %1069 = vmatprep.mubr.f32.mxu0 %v892
        %1070 = vmatmul.mubr.f32.gmra.mrb[0].mxu0 %v891
        %v1071 = vpop.f32.mrb[0].mxu0
        %v1072 = vadd.f32 %v998, %v1071
        %v1073 = vpop.f32.mrb[0].mxu0
        %v1074 = vadd.f32 %v1002, %v1073
        %1075 = vmatprep.mubr.f32.mxu0 %v895
        %1076 = vmatmul.mubr.f32.gmra.mrb[0].mxu0 %v894
        %v1077 = vpop.f32.mrb[0].mxu0
        %v1078 = vadd.f32 %v998, %v1077
        %v1079 = vpop.f32.mrb[0].mxu0
        %v1080 = vadd.f32 %v1002, %v1079
        %1081 = vdwg.mxu0
        %1082 = vmatprep.subr.mxu0 %v962
        %1083 = vmatpush1.msra.mxu0 %v961
        %1084 = vmatprep.subr.mxu0 %v964
        %1085 = vmatpush1.msra.mxu0 %v963
        %1086 = vmatprep.subr.mxu0 %v966
        %1087 = vmatpush1.msra.mxu0 %v965
        %1088 = vmatprep.subr.mxu0 %v968
        %1089 = vmatpush1.msra.mxu0 %v967
        %1090 = vmatprep.subr.mxu0 %v970
        %1091 = vmatpush1.msra.mxu0 %v969
        %1092 = vmatprep.subr.mxu0 %v972
        %1093 = vmatpush1.msra.mxu0 %v971
        %1094 = vmatprep.subr.mxu0 %v974
        %1095 = vmatpush1.msra.mxu0 %v973
        %1096 = vmatprep.subr.mxu0 %v976
        %1097 = vmatpush1.msra.mxu0 %v975
        %1098 = vmatprep.subr.mxu0 %v978
        %1099 = vmatpush1.msra.mxu0 %v977
        %1100 = vmatprep.subr.mxu0 %v980
        %1101 = vmatpush1.msra.mxu0 %v979
        %1102 = vmatprep.subr.mxu0 %v982
        %1103 = vmatpush1.msra.mxu0 %v981
        %1104 = vmatprep.subr.mxu0 %v984
        %1105 = vmatpush1.msra.mxu0 %v983
        %1106 = vmatprep.subr.mxu0 %v986
        %1107 = vmatpush1.msra.mxu0 %v985
        %1108 = vmatprep.subr.mxu0 %v988
        %1109 = vmatpush1.msra.mxu0 %v987
        %1110 = vmatprep.subr.mxu0 %v990
        %1111 = vmatpush1.msra.mxu0 %v989
        %1112 = vmatprep.subr.mxu0 %v992
        %1113 = vmatpush1.msra.mxu0 %v991
        %1114 = vmatprep.subr.mxu0 0.0
        %1115 = vmatpush1.msra.mxu0 0.0
        %1116 = vmatprep.subr.mxu0 0.0
        %1117 = vmatpush1.msra.mxu0 0.0
        %1118 = vmatprep.subr.mxu0 0.0
        %1119 = vmatpush1.msra.mxu0 0.0
        %1120 = vmatprep.subr.mxu0 0.0
        %1121 = vmatpush1.msra.mxu0 0.0
        %1122 = vmatprep.subr.mxu0 0.0
        %1123 = vmatpush1.msra.mxu0 0.0
        %1124 = vmatprep.subr.mxu0 0.0
        %1125 = vmatpush1.msra.mxu0 0.0
        %1126 = vmatprep.subr.mxu0 0.0
        %1127 = vmatpush1.msra.mxu0 0.0
        %1128 = vmatprep.subr.mxu0 0.0
        %1129 = vmatpush1.msra.mxu0 0.0
        %1130 = vmatprep.subr.mxu0 0.0
        %1131 = vmatpush1.msra.mxu0 0.0
        %1132 = vmatprep.subr.mxu0 0.0
        %1133 = vmatpush1.msra.mxu0 0.0
        %1134 = vmatprep.subr.mxu0 0.0
        %1135 = vmatpush1.msra.mxu0 0.0
        %1136 = vmatprep.subr.mxu0 0.0
        %1137 = vmatpush1.msra.mxu0 0.0
        %1138 = vmatprep.subr.mxu0 0.0
        %1139 = vmatpush1.msra.mxu0 0.0
        %1140 = vmatprep.subr.mxu0 0.0
        %1141 = vmatpush1.msra.mxu0 0.0
        %1142 = vmatprep.subr.mxu0 0.0
        %1143 = vmatpush1.msra.mxu0 0.0
        %1144 = vmatprep.subr.mxu0 0.0
        %1145 = vmatpush1.msra.mxu0 0.0
        %1146 = vmatprep.mubr.f32.mxu0 0.0
        %1147 = vmatmul.mubr.f32.gmra.mrb[0].mxu0 %v893
        %v1148 = vpop.f32.mrb[0].mxu0
        %v1149 = vadd.f32 %v1072, %v1148
        %v1150 = vpop.f32.mrb[0].mxu0
        %v1151 = vadd.f32 %v1074, %v1150
        %1152 = vmatprep.mubr.f32.mxu0 0.0
        %1153 = vmatmul.mubr.f32.gmra.mrb[0].mxu0 %v896
        %v1154 = vpop.f32.mrb[0].mxu0
        %v1155 = vadd.f32 %v1078, %v1154
        %v1156 = vpop.f32.mrb[0].mxu0
        %v1157 = vadd.f32 %v1080, %v1156
        %1158 = vdwg.mxu0
        %v1159 = vtanh.pop %v1149
        %v1160 = vtanh.pop %v1151
        %v1161 = vtanh.pop %v1155
        %v1162 = vtanh.pop %v1157
        %v1163 = vld [vmem:[%s5] sm:$0xff]
        %v1164 = vld [vmem:[%s5 + $0x8] sm:$0xff]
        %v1165 = vld [vmem:[%s5 + $0x10] sm:$0xff]
        %v1166 = vld [vmem:[%s5 + $0x18] sm:$0xff]
        %v1167 = vld [vmem:[%s5 + $0x20] sm:$0xff]
        %v1168 = vld [vmem:[%s5 + $0x28] sm:$0xff]
        %v1169 = vld [vmem:[%s5 + $0x30] sm:$0xff]
        %v1170 = vld [vmem:[%s5 + $0x38] sm:$0xff]
        %v1171 = vld [vmem:[%s5 + $0x40] sm:$0xff]
        %v1172 = vld [vmem:[%s5 + $0x48] sm:$0xff]
        %v1173 = vld [vmem:[%s5 + $0x50] sm:$0xff]
        %v1174 = vld [vmem:[%s5 + $0x58] sm:$0xff]
        %v1175 = vld [vmem:[%s5 + $0x60] sm:$0xff]
        %v1176 = vld [vmem:[%s5 + $0x68] sm:$0xff]
        %v1177 = vld [vmem:[%s5 + $0x70] sm:$0xff]
        %v1178 = vld [vmem:[%s5 + $0x78] sm:$0xff]
        %v1179 = vld [vmem:[%s5 + $0x80] sm:$0xff]
        %v1180 = vld [vmem:[%s5 + $0x88] sm:$0xff]
        %v1181 = vld [vmem:[%s5 + $0x90] sm:$0xff]
        %v1182 = vld [vmem:[%s5 + $0x98] sm:$0xff]
        %v1183 = vld [vmem:[%s5 + $0xa0] sm:$0xff]
        %v1184 = vld [vmem:[%s5 + $0xa8] sm:$0xff]
        %v1185 = vld [vmem:[%s5 + $0xb0] sm:$0xff]
        %v1186 = vld [vmem:[%s5 + $0xb8] sm:$0xff]
        %v1187 = vld [vmem:[%s5 + $0xc0] sm:$0xff]
        %v1188 = vld [vmem:[%s5 + $0xc8] sm:$0xff]
        %v1189 = vld [vmem:[%s5 + $0xd0] sm:$0xff]
        %v1190 = vld [vmem:[%s5 + $0xd8] sm:$0xff]
        %v1191 = vld [vmem:[%s5 + $0xe0] sm:$0xff]
        %v1192 = vld [vmem:[%s5 + $0xe8] sm:$0xff]
        %v1193 = vld [vmem:[%s5 + $0xf0] sm:$0xff]
        %v1194 = vld [vmem:[%s5 + $0xf8] sm:$0xff]
        %v1195 = vld [vmem:[%s6] sm:$0x1]
        %v1197 = vlaneseq
        %v1198 = vshrl.u32 %v1197, 7
        %v1199 = vsub.s32 0, %v1198
        %v1200 = vrot.slane %v1195, %v1199
        %1202 = vmatprep.subr.mxu0 0.0
        %1203 = vmatpush1.msra.mxu0 %v1163
        %1204 = vmatprep.subr.mxu0 0.0
        %1205 = vmatpush1.msra.mxu0 %v1164
        %1206 = vmatprep.subr.mxu0 0.0
        %1207 = vmatpush1.msra.mxu0 %v1165
        %1208 = vmatprep.subr.mxu0 0.0
        %1209 = vmatpush1.msra.mxu0 %v1166
        %1210 = vmatprep.subr.mxu0 0.0
        %1211 = vmatpush1.msra.mxu0 %v1167
        %1212 = vmatprep.subr.mxu0 0.0
        %1213 = vmatpush1.msra.mxu0 %v1168
        %1214 = vmatprep.subr.mxu0 0.0
        %1215 = vmatpush1.msra.mxu0 %v1169
        %1216 = vmatprep.subr.mxu0 0.0
        %1217 = vmatpush1.msra.mxu0 %v1170
        %1218 = vmatprep.subr.mxu0 0.0
        %1219 = vmatpush1.msra.mxu0 %v1171
        %1220 = vmatprep.subr.mxu0 0.0
        %1221 = vmatpush1.msra.mxu0 %v1172
        %1222 = vmatprep.subr.mxu0 0.0
        %1223 = vmatpush1.msra.mxu0 %v1173
        %1224 = vmatprep.subr.mxu0 0.0
        %1225 = vmatpush1.msra.mxu0 %v1174
        %1226 = vmatprep.subr.mxu0 0.0
        %1227 = vmatpush1.msra.mxu0 %v1175
        %1228 = vmatprep.subr.mxu0 0.0
        %1229 = vmatpush1.msra.mxu0 %v1176
        %1230 = vmatprep.subr.mxu0 0.0
        %1231 = vmatpush1.msra.mxu0 %v1177
        %1232 = vmatprep.subr.mxu0 0.0
        %1233 = vmatpush1.msra.mxu0 %v1178
        %1234 = vmatprep.subr.mxu0 0.0
        %1235 = vmatpush1.msra.mxu0 %v1179
        %1236 = vmatprep.subr.mxu0 0.0
        %1237 = vmatpush1.msra.mxu0 %v1180
        %1238 = vmatprep.subr.mxu0 0.0
        %1239 = vmatpush1.msra.mxu0 %v1181
        %1240 = vmatprep.subr.mxu0 0.0
        %1241 = vmatpush1.msra.mxu0 %v1182
        %1242 = vmatprep.subr.mxu0 0.0
        %1243 = vmatpush1.msra.mxu0 %v1183
        %1244 = vmatprep.subr.mxu0 0.0
        %1245 = vmatpush1.msra.mxu0 %v1184
        %1246 = vmatprep.subr.mxu0 0.0
        %1247 = vmatpush1.msra.mxu0 %v1185
        %1248 = vmatprep.subr.mxu0 0.0
        %1249 = vmatpush1.msra.mxu0 %v1186
        %1250 = vmatprep.subr.mxu0 0.0
        %1251 = vmatpush1.msra.mxu0 %v1187
        %1252 = vmatprep.subr.mxu0 0.0
        %1253 = vmatpush1.msra.mxu0 %v1188
        %1254 = vmatprep.subr.mxu0 0.0
        %1255 = vmatpush1.msra.mxu0 %v1189
        %1256 = vmatprep.subr.mxu0 0.0
        %1257 = vmatpush1.msra.mxu0 %v1190
        %1258 = vmatprep.subr.mxu0 0.0
        %1259 = vmatpush1.msra.mxu0 %v1191
        %1260 = vmatprep.subr.mxu0 0.0
        %1261 = vmatpush1.msra.mxu0 %v1192
        %1262 = vmatprep.subr.mxu0 0.0
        %1263 = vmatpush1.msra.mxu0 %v1193
        %1264 = vmatprep.subr.mxu0 0.0
        %1265 = vmatpush1.msra.mxu0 %v1194
        %1266 = vmatprep.mubr.f32.mxu0 %v1160
        %1267 = vmatmul.mubr.f32.gmra.mrb[0].mxu0 %v1159
        %v1268 = vpop.f32.mrb[0].mxu0
        %v1269 = vadd.f32 %v1200, %v1268
        %v1270 = vpop.f32.mrb[0].mxu0
        %1271 = vmatprep.mubr.f32.mxu0 %v1162
        %1272 = vmatmul.mubr.f32.gmra.mrb[0].mxu0 %v1161
        %v1273 = vpop.f32.mrb[0].mxu0
        %v1274 = vadd.f32 %v1200, %v1273
        %v1275 = vpop.f32.mrb[0].mxu0
        %1276 = vdwg.mxu0
        %1277 = vst [vmem:[%s285] sm:$0xff] %v1269
        %1278 = vst [vmem:[%s285 + $0x8] sm:$0xff] %v1274
        %s1279 = sand.u32 %s195, 1
        %s1280 = scalar_lea.sflag [#allocation3], %s1279
        %s1281 = sand.u32 %s195, 1
        %s1282 = smul.addr %s1281, 16
        %s1283 = scalar_lea.vmem [#allocation2], %s1282
        // Predicated region
        $region49: #{recognition_forward.1} parent=47 // pred_check
          %p1284 = pneg %p205
        $region50: #{recognition_forward.1} parent=47 // pred_check_branch
          %1286 = sbr.rel (%p1284) target = $region52
        $region51: #{recognition_forward.1} parent=47 // pred_region
          %s1287 = smul.u32 2, %s26
          %s1289 = ssub.s32 256, 256
          %1290 = vsyncadd %s1280, %s1289
          %s1291 = smul.addr %s25, 2
          %s1292 = sadd.s32 %s1287, %s1291
          %s1293 = smul.addr %s1292, 128
          %s1294 = scalar_lea.hbm %s7, %s1293
          %s1295 = sshll.u32 %s1283, 4
          %s1296 = int_to_ptr.vmem [resolvable:$true] %s1295
          %1301 = dma.vmem_to_hbm [thread:$0]  %s1296, 256, %s1294, %s1280, 128, 128, 8
        $region52: #{recognition_forward.1} parent=47 // pred_fallthru
          _
      $region48: #{recognition_forward.1} parent=5 // pred_fallthru
        _
      %p1302 = scmp.le.s32.totalorder 2, %s16
      // Predicated region
      $region53: #{recognition_forward.1} parent=5 // pred_check
        %p1303 = pneg %p1302
      $region54: #{recognition_forward.1} parent=5 // pred_check_branch
        %1305 = sbr.rel (%p1303) target = $region56
      $region55: #{recognition_forward.1} parent=5 // pred_region
        %s1306 = ssub.s32 %s16, 2
        // Predicated region
        $region57: #{recognition_forward.1} parent=55 // pred_check
          %p1307 = pneg %p211
        $region58: #{recognition_forward.1} parent=55 // pred_check_branch
          %1309 = sbr.rel (%p1307) target = $region60
        $region59: #{recognition_forward.1} parent=55 // pred_region
          %s1310 = sand.u32 %s196, 1
          %s1311 = scalar_lea.sflag [#allocation3], %s1310
          %s1312 = sand.u32 %s196, 1
          %s1313 = smul.addr %s1312, 16
          %s1314 = scalar_lea.vmem [#allocation2], %s1313
          %1315 = dma.done %s1311, 256
        $region60: #{recognition_forward.1} parent=55 // pred_fallthru
          _
      $region56: #{recognition_forward.1} parent=5 // pred_fallthru
        _
    $region6: #{recognition_forward.1} parent=1 // loop_footer
      %s20 = sadd.s32 1, %s16
    $region7: #{recognition_forward.1} parent=1 // loop_footer_branch
      %15 = sbr.rel target = $region3
    $region8: #{recognition_forward.1} parent=1 // loop_exit
      _
    %1316 = vsyncpa [#allocation3], 1
    %s1317 = scalar_lea.sflag [#allocation3], 1
    %1318 = vsyncpa %s1317, 1

</llo_original>
